<compile_context>
chip_gen: v7x
topology: tpu7x:2x2x1
jax: 0.10.0
libtpu: 0.0.40
codegen_flags: <defaults>
</compile_context>

<pallas_src>
import numpy as np
import jax
import jax.numpy as jnp
from jax.experimental import pallas as pl
from jax.experimental.pallas import tpu as pltpu

CIN, COUT, KH, KW = 6, 16, 5, 5
H, W = 12, 12                      # fixed by view(-1, 256): pool->4x4 -> conv->8x8 -> in 12x12
OH, OW = H - KH + 1, W - KW + 1    # 8, 8
PH, PW = OH // 2, OW // 2          # 4, 4
KCOLS = CIN * H * W                # 864   (contraction dim = flattened input)
OUTC = COUT * PH * PW              # 256   (final lane-dense output width)
NCOLS = 4 * OUTC                   # 1024  (4 pool-window offsets x 256)


# ---------------------------------------------------------------------------
# Single fused kernel: conv (as one big matmul) + 2x2 maxpool + bias + ReLU
# ---------------------------------------------------------------------------
def fused_conv_pool_relu_kernel(x_ref, w_ref, b_ref, o_ref):
    # x_ref: (bm, 864)  w_ref: (864, 1024)  b_ref: (1, 256)  o_ref: (bm, 256)
    y = jnp.dot(x_ref[...], w_ref[...], preferred_element_type=jnp.float32)
    # 2x2 max-pool == max over the 4 lane-aligned 256-wide column groups
    # (static 128-multiple slices -> free vreg selection, no XLU traffic).
    m = jnp.maximum(jnp.maximum(y[:, 0 * OUTC:1 * OUTC], y[:, 1 * OUTC:2 * OUTC]),
                    jnp.maximum(y[:, 2 * OUTC:3 * OUTC], y[:, 3 * OUTC:4 * OUTC]))
    # bias is identical across the 4 groups, so it commutes with the max;
    # relu(pool(relu(.))) == relu(max(.) + b) -> one ReLU total.
    o_ref[...] = jnp.maximum(m + b_ref[...], 0.0)


# ---------------------------------------------------------------------------
# One-time parameter preprocessing (host side; analogous to a weight reshape).
# W_big[(ci, h, w), (dh, dw, c, ph, pw)] = weight[c, ci, h-2ph-dh, w-2pw-dw]
#                                          (0 where the kernel index is OOB)
# ---------------------------------------------------------------------------
def prepare_weights(weight, bias):
    w = np.asarray(weight, dtype=np.float32)   # (COUT, CIN, KH, KW)
    b = np.asarray(bias, dtype=np.float32)     # (COUT,)
    w_big = np.zeros((CIN, H, W, 2, 2, COUT, PH, PW), np.float32)
    for kh in range(KH):
        for kw in range(KW):
            for dh in range(2):
                for dw in range(2):
                    for ph in range(PH):
                        for pw in range(PW):
                            hh = 2 * ph + dh + kh
                            ww = 2 * pw + dw + kw
                            w_big[:, hh, ww, dh, dw, :, ph, pw] = w[:, :, kh, kw].T
    w_big = w_big.reshape(KCOLS, NCOLS)                       # rows (ci,h,w), cols (dh,dw,c,ph,pw)
    b_row = np.broadcast_to(b[:, None, None], (COUT, PH, PW)).reshape(1, OUTC)
    return jnp.asarray(w_big), jnp.asarray(np.ascontiguousarray(b_row))


# ---------------------------------------------------------------------------
# Forward: one reshape (free, contiguous) + one pallas_call
# ---------------------------------------------------------------------------
def model_forward(x, w_big, b_row):
    n = x.shape[0]
    xf = x.reshape(n, KCOLS)                                  # (n, 864), bit-identical layout
    # Batch tiling: single full block for small n (block 2nd-last dim == full
    # array dim satisfies the (8,128) rule); 512-row "parallel" tiles for large
    # n, with partial trailing tiles handled by Pallas (grid = cdiv).
    bm = n if n <= 512 else 512
    grid = (pl.cdiv(n, bm),)
    return pl.pallas_call(
        fused_conv_pool_relu_kernel,
        out_shape=jax.ShapeDtypeStruct((n, OUTC), jnp.float32),
        grid=grid,
        in_specs=[
            pl.BlockSpec((bm, KCOLS), lambda i: (i, 0)),
            pl.BlockSpec((KCOLS, NCOLS), lambda i: (0, 0)),   # VMEM-resident weights
            pl.BlockSpec((1, OUTC), lambda i: (0, 0)),
        ],
        out_specs=pl.BlockSpec((bm, OUTC), lambda i: (i, 0)),
        compiler_params=pltpu.CompilerParams(
            dimension_semantics=("parallel",)),
    )(xf, w_big, b_row)


# ---------------------------------------------------------------------------
if __name__ == "__main__":
    key = jax.random.PRNGKey(0)
    kx, kw_, kb = jax.random.split(key, 3)

    # Input (N, 6, 12, 12) -> conv -> (N, 16, 8, 8) -> pool -> (N, 16, 4, 4)
    # -> view(-1, 256), exactly as the PyTorch module requires.
    N = 2
    x = jax.random.normal(kx, (N, CIN, H, W), dtype=jnp.float32)
    weight = 0.1 * jax.random.normal(kw_, (COUT, CIN, KH, KW), dtype=jnp.float32)
    bias = 0.1 * jax.random.normal(kb, (COUT,), dtype=jnp.float32)

    w_big, b_row = prepare_weights(weight, bias)
    fwd = jax.jit(model_forward)
    out = jax.block_until_ready(fwd(x, w_big, b_row))
    assert out.shape == (N, 256), out.shape

    # Reference (plain JAX) for sanity.
    ref = jax.lax.conv_general_dilated(
        x, weight, (1, 1), "VALID",
        dimension_numbers=("NCHW", "OIHW", "NCHW"),
    ) + bias.reshape(1, COUT, 1, 1)
    ref = jnp.maximum(ref, 0.0)
    ref = jax.lax.reduce_window(ref, -jnp.inf, jax.lax.max,
                                (1, 1, 2, 2), (1, 1, 2, 2), "VALID")
    ref = jnp.maximum(ref.reshape(-1, 256), 0.0)

    np.testing.assert_allclose(np.asarray(out), np.asarray(ref),
                               rtol=1e-4, atol=1e-4)
    print("KERNEL_OK")
</pallas_src>

<mosaic_0001>
module attributes {stable_mosaic.version = 11 : i64} {
  func.func @fused_conv_pool_relu_kernel(%arg0: i32, %arg1: memref<2x864xf32, #tpu.memory_space<vmem>>, %arg2: memref<864x1024xf32, #tpu.memory_space<vmem>>, %arg3: memref<1x256xf32, #tpu.memory_space<vmem>>, %arg4: memref<2x256xf32, #tpu.memory_space<vmem>>) attributes {dimension_semantics = [#tpu.dimension_semantics<parallel>], iteration_bounds = array<i64: 1>, scalar_prefetch = 0 : i64, scratch_operands = 0 : i64, tpu.core_type = #tpu.core_type<tc>, window_params = [{transform_indices = @transform_0, window_bounds = array<i64: 2, 864>}, {pipeline_mode = #tpu.pipeline_mode<synchronous>, transform_indices = @transform_1, window_bounds = array<i64: 864, 1024>}, {pipeline_mode = #tpu.pipeline_mode<synchronous>, transform_indices = @transform_2, window_bounds = array<i64: 1, 256>}, {transform_indices = @transform_3, window_bounds = array<i64: 2, 256>}]} {
    %c0 = arith.constant 0 : index
    %c0_0 = arith.constant 0 : index
    %0 = vector.load %arg1[%c0, %c0_0] : memref<2x864xf32, #tpu.memory_space<vmem>>, vector<2x864xf32>
    %c0_1 = arith.constant 0 : index
    %c0_2 = arith.constant 0 : index
    %1 = vector.load %arg2[%c0_1, %c0_2] : memref<864x1024xf32, #tpu.memory_space<vmem>>, vector<864x1024xf32>
    %cst = arith.constant dense<0.000000e+00> : vector<2x1024xf32>
    %2 = tpu.matmul %0, %1, %cst {dimension_numbers = #tpu.dot_dimension_numbers<[1], [0], [0], [1], [0, 0, 1, 1], [], []>} : vector<2x864xf32>, vector<864x1024xf32>, vector<2x1024xf32> -> vector<2x1024xf32>
    %3 = vector.extract_strided_slice %2 {offsets = [0, 0], sizes = [2, 256], strides = [1, 1]} : vector<2x1024xf32> to vector<2x256xf32>
    %4 = vector.extract_strided_slice %2 {offsets = [0, 256], sizes = [2, 256], strides = [1, 1]} : vector<2x1024xf32> to vector<2x256xf32>
    %5 = arith.maximumf %3, %4 : vector<2x256xf32>
    %6 = vector.extract_strided_slice %2 {offsets = [0, 512], sizes = [2, 256], strides = [1, 1]} : vector<2x1024xf32> to vector<2x256xf32>
    %7 = vector.extract_strided_slice %2 {offsets = [0, 768], sizes = [2, 256], strides = [1, 1]} : vector<2x1024xf32> to vector<2x256xf32>
    %8 = arith.maximumf %6, %7 : vector<2x256xf32>
    %9 = arith.maximumf %5, %8 : vector<2x256xf32>
    %c0_3 = arith.constant 0 : index
    %c0_4 = arith.constant 0 : index
    %10 = vector.load %arg3[%c0_3, %c0_4] : memref<1x256xf32, #tpu.memory_space<vmem>>, vector<1x256xf32>
    %11 = vector.broadcast %10 : vector<1x256xf32> to vector<2x256xf32>
    %12 = arith.addf %9, %11 : vector<2x256xf32>
    %cst_5 = arith.constant 0.000000e+00 : f32
    %13 = vector.broadcast %cst_5 : f32 to vector<2x256xf32>
    %14 = arith.maximumf %12, %13 : vector<2x256xf32>
    %c0_6 = arith.constant 0 : index
    %c0_7 = arith.constant 0 : index
    %15 = vector.load %arg4[%c0_6, %c0_7] : memref<2x256xf32, #tpu.memory_space<vmem>>, vector<2x256xf32>
    tpu.vector_store %arg4[%c0_6, %c0_7], %14 {strides = array<i32>} : memref<2x256xf32, #tpu.memory_space<vmem>>, vector<2x256xf32>,
    return
  }
  func.func @transform_0(%arg0: i32) -> (i32, i32) {
    %c0_i32 = arith.constant 0 : i32
    %c0_i32_0 = arith.constant 0 : i32
    return %arg0, %c0_i32 : i32, i32
  }
  func.func @transform_1(%arg0: i32) -> (i32, i32) {
    %c0_i32 = arith.constant 0 : i32
    %c0_i32_0 = arith.constant 0 : i32
    %c0_i32_1 = arith.constant 0 : i32
    return %c0_i32, %c0_i32_0 : i32, i32
  }
  func.func @transform_2(%arg0: i32) -> (i32, i32) {
    %c0_i32 = arith.constant 0 : i32
    %c0_i32_0 = arith.constant 0 : i32
    %c0_i32_1 = arith.constant 0 : i32
    return %c0_i32, %c0_i32_0 : i32, i32
  }
  func.func @transform_3(%arg0: i32) -> (i32, i32) {
    %c0_i32 = arith.constant 0 : i32
    %c0_i32_0 = arith.constant 0 : i32
    return %arg0, %c0_i32 : i32, i32
  }
}

</mosaic_0001>

<llo_original>
// kernel: model_forward.1
$region0: #{model_forward.1}
  #allocation0 [shape = 'u32[]', space=smem, size = 0x4, offset = 0x4, fixed_abs, tag = 'smem constant byte address 0x4 - core index']
  #allocation1 [shape = 'u32[144,128]{1,0:T(1,128)}', space=vmem, size = 0x12000, scoped, tag = 'internal scratch']
  %s0 = inlined_call_operand.vmem [shape: f32[2,864], index: 0, kind: input, shape index: {}]
  %s1 = inlined_call_operand.hbm [shape: f32[864,1024], index: 1, kind: input, shape index: {}]
  %s2 = inlined_call_operand.hbm [shape: f32[1,256], index: 2, kind: input, shape index: {}]
  %s3 = inlined_call_operand.hbm [shape: f32[2,256], index: 3, kind: output, shape index: {}]
  %s4 = sld [smem:[#allocation0]]
  $region30: #{model_forward.1} parent=0
    _
  %s6 = ssub.s32 1, %s4
  %s7 = scalar_select 0, %s6, %s4
  $region1: #{model_forward.1} parent=0
    #allocation2 [shape = 'u8[3538944]{0}', space=vmem, size = 0x360000, scoped, tag = 'input window, operand 1, single buffered']
    #allocation3 [shape = 's32[1]{0}', space=sflag, size = 0x4, scoped, tag = 'scoped memory for model_forward.1']
    #allocation4 [shape = 's32[1]{0}', space=sflag, size = 0x4, scoped, tag = 'scoped memory for model_forward.1']
    #allocation5 [shape = 'u8[1024]{0}', space=vmem, size = 0x400, scoped, tag = 'input window, operand 2, single buffered']
    #allocation6 [shape = 's32[1]{0}', space=sflag, size = 0x4, scoped, tag = 'scoped memory for model_forward.1']
    #allocation7 [shape = 'u8[2048]{0}', space=vmem, size = 0x800, scoped, tag = 'output window, operand 0, single buffered']
    %8 = vsyncpa [#allocation3], 0
    %9 = vsyncpa [#allocation6], 0
    %10 = vsyncpa [#allocation4], 0
    // Predicated region
    $region2: #{model_forward.1} parent=1 // pred_check
      _
    $region3: #{model_forward.1} parent=1 // pred_check_branch
      %12 = sbr.rel (0) target = $region5
    $region4: #{model_forward.1} parent=1 // pred_region
      _
    $region5: #{model_forward.1} parent=1 // pred_fallthru
      _
    // Predicated region
    $region6: #{model_forward.1} parent=1 // pred_check
      _
    $region7: #{model_forward.1} parent=1 // pred_check_branch
      %14 = sbr.rel (0) target = $region9
    $region8: #{model_forward.1} parent=1 // pred_region
      %s16 = ssub.s32 110592, 110592
      %17 = vsyncadd [#allocation3], %s16
      %s18 = sshll.u32 [#allocation2], 4
      %s19 = int_to_ptr.vmem [resolvable:$true] %s18
      %24 = dma.hbm_to_vmem [thread:$0]  %s1, 110592, %s19, [#allocation3], 1024, 1024, 64
    $region9: #{model_forward.1} parent=1 // pred_fallthru
      _
    // Predicated region
    $region10: #{model_forward.1} parent=1 // pred_check
      _
    $region11: #{model_forward.1} parent=1 // pred_check_branch
      %26 = sbr.rel (0) target = $region13
    $region12: #{model_forward.1} parent=1 // pred_region
      %s28 = ssub.s32 32, 32
      %29 = vsyncadd [#allocation6], %s28
      %s31 = sshll.u32 [#allocation5], 4
      %s32 = int_to_ptr.vmem [resolvable:$true] %s31
      %34 = dma.hbm_to_vmem [thread:$0]  %s2, 32, %s32, [#allocation6]
    $region13: #{model_forward.1} parent=1 // pred_fallthru
      _
    // Predicated region
    $region14: #{model_forward.1} parent=1 // pred_check
      _
    $region15: #{model_forward.1} parent=1 // pred_check_branch
      %36 = sbr.rel (0) target = $region17
    $region16: #{model_forward.1} parent=1 // pred_region
      %37 = dma.done [#allocation3], 110592
    $region17: #{model_forward.1} parent=1 // pred_fallthru
      _
    // Predicated region
    $region18: #{model_forward.1} parent=1 // pred_check
      _
    $region19: #{model_forward.1} parent=1 // pred_check_branch
      %39 = sbr.rel (0) target = $region21
    $region20: #{model_forward.1} parent=1 // pred_region
      %40 = dma.done [#allocation6], 32
    $region21: #{model_forward.1} parent=1 // pred_fallthru
      _
    %v41 = vld [vmem:[%s0] sm:$0xff]
    %v42 = vld [vmem:[%s0 + $0x8] sm:$0x3f]
    %v43 = vld [vmem:[#allocation2] sm:$0xff]
    %v44 = vld [vmem:[#allocation2 + $0x8] sm:$0xff]
    %v45 = vld [vmem:[#allocation2 + $0x10] sm:$0xff]
    %v46 = vld [vmem:[#allocation2 + $0x18] sm:$0xff]
    %v47 = vld [vmem:[#allocation2 + $0x20] sm:$0xff]
    %v48 = vld [vmem:[#allocation2 + $0x28] sm:$0xff]
    %v49 = vld [vmem:[#allocation2 + $0x30] sm:$0xff]
    %v50 = vld [vmem:[#allocation2 + $0x38] sm:$0xff]
    %v51 = vld [vmem:[#allocation2 + $0x40] sm:$0xff]
    %v52 = vld [vmem:[#allocation2 + $0x48] sm:$0xff]
    %v53 = vld [vmem:[#allocation2 + $0x50] sm:$0xff]
    %v54 = vld [vmem:[#allocation2 + $0x58] sm:$0xff]
    %v55 = vld [vmem:[#allocation2 + $0x60] sm:$0xff]
    %v56 = vld [vmem:[#allocation2 + $0x68] sm:$0xff]
    %v57 = vld [vmem:[#allocation2 + $0x70] sm:$0xff]
    %v58 = vld [vmem:[#allocation2 + $0x78] sm:$0xff]
    %v59 = vld [vmem:[#allocation2 + $0x80] sm:$0xff]
    %v60 = vld [vmem:[#allocation2 + $0x88] sm:$0xff]
    %v61 = vld [vmem:[#allocation2 + $0x90] sm:$0xff]
    %v62 = vld [vmem:[#allocation2 + $0x98] sm:$0xff]
    %v63 = vld [vmem:[#allocation2 + $0xa0] sm:$0xff]
    %v64 = vld [vmem:[#allocation2 + $0xa8] sm:$0xff]
    %v65 = vld [vmem:[#allocation2 + $0xb0] sm:$0xff]
    %v66 = vld [vmem:[#allocation2 + $0xb8] sm:$0xff]
    %v67 = vld [vmem:[#allocation2 + $0xc0] sm:$0xff]
    %v68 = vld [vmem:[#allocation2 + $0xc8] sm:$0xff]
    %v69 = vld [vmem:[#allocation2 + $0xd0] sm:$0xff]
    %v70 = vld [vmem:[#allocation2 + $0xd8] sm:$0xff]
    %v71 = vld [vmem:[#allocation2 + $0xe0] sm:$0xff]
    %v72 = vld [vmem:[#allocation2 + $0xe8] sm:$0xff]
    %v73 = vld [vmem:[#allocation2 + $0xf0] sm:$0xff]
    %v74 = vld [vmem:[#allocation2 + $0xf8] sm:$0xff]
    %v75 = vld [vmem:[#allocation2 + $0x100] sm:$0xff]
    %v76 = vld [vmem:[#allocation2 + $0x108] sm:$0xff]
    %v77 = vld [vmem:[#allocation2 + $0x110] sm:$0xff]
    %v78 = vld [vmem:[#allocation2 + $0x118] sm:$0xff]
    %v79 = vld [vmem:[#allocation2 + $0x120] sm:$0xff]
    %v80 = vld [vmem:[#allocation2 + $0x128] sm:$0xff]
    %v81 = vld [vmem:[#allocation2 + $0x130] sm:$0xff]
    %v82 = vld [vmem:[#allocation2 + $0x138] sm:$0xff]
    %v83 = vld [vmem:[#allocation2 + $0x140] sm:$0xff]
    %v84 = vld [vmem:[#allocation2 + $0x148] sm:$0xff]
    %v85 = vld [vmem:[#allocation2 + $0x150] sm:$0xff]
    %v86 = vld [vmem:[#allocation2 + $0x158] sm:$0xff]
    %v87 = vld [vmem:[#allocation2 + $0x160] sm:$0xff]
    %v88 = vld [vmem:[#allocation2 + $0x168] sm:$0xff]
    %v89 = vld [vmem:[#allocation2 + $0x170] sm:$0xff]
    %v90 = vld [vmem:[#allocation2 + $0x178] sm:$0xff]
    %v91 = vld [vmem:[#allocation2 + $0x180] sm:$0xff]
    %v92 = vld [vmem:[#allocation2 + $0x188] sm:$0xff]
    %v93 = vld [vmem:[#allocation2 + $0x190] sm:$0xff]
    %v94 = vld [vmem:[#allocation2 + $0x198] sm:$0xff]
    %v95 = vld [vmem:[#allocation2 + $0x1a0] sm:$0xff]
    %v96 = vld [vmem:[#allocation2 + $0x1a8] sm:$0xff]
    %v97 = vld [vmem:[#allocation2 + $0x1b0] sm:$0xff]
    %v98 = vld [vmem:[#allocation2 + $0x1b8] sm:$0xff]
    %v99 = vld [vmem:[#allocation2 + $0x1c0] sm:$0xff]
    %v100 = vld [vmem:[#allocation2 + $0x1c8] sm:$0xff]
    %v101 = vld [vmem:[#allocation2 + $0x1d0] sm:$0xff]
    %v102 = vld [vmem:[#allocation2 + $0x1d8] sm:$0xff]
    %v103 = vld [vmem:[#allocation2 + $0x1e0] sm:$0xff]
    %v104 = vld [vmem:[#allocation2 + $0x1e8] sm:$0xff]
    %v105 = vld [vmem:[#allocation2 + $0x1f0] sm:$0xff]
    %v106 = vld [vmem:[#allocation2 + $0x1f8] sm:$0xff]
    %v107 = vld [vmem:[#allocation2 + $0x200] sm:$0xff]
    %v108 = vld [vmem:[#allocation2 + $0x208] sm:$0xff]
    %v109 = vld [vmem:[#allocation2 + $0x210] sm:$0xff]
    %v110 = vld [vmem:[#allocation2 + $0x218] sm:$0xff]
    %v111 = vld [vmem:[#allocation2 + $0x220] sm:$0xff]
    %v112 = vld [vmem:[#allocation2 + $0x228] sm:$0xff]
    %v113 = vld [vmem:[#allocation2 + $0x230] sm:$0xff]
    %v114 = vld [vmem:[#allocation2 + $0x238] sm:$0xff]
    %v115 = vld [vmem:[#allocation2 + $0x240] sm:$0xff]
    %v116 = vld [vmem:[#allocation2 + $0x248] sm:$0xff]
    %v117 = vld [vmem:[#allocation2 + $0x250] sm:$0xff]
    %v118 = vld [vmem:[#allocation2 + $0x258] sm:$0xff]
    %v119 = vld [vmem:[#allocation2 + $0x260] sm:$0xff]
    %v120 = vld [vmem:[#allocation2 + $0x268] sm:$0xff]
    %v121 = vld [vmem:[#allocation2 + $0x270] sm:$0xff]
    %v122 = vld [vmem:[#allocation2 + $0x278] sm:$0xff]
    %v123 = vld [vmem:[#allocation2 + $0x280] sm:$0xff]
    %v124 = vld [vmem:[#allocation2 + $0x288] sm:$0xff]
    %v125 = vld [vmem:[#allocation2 + $0x290] sm:$0xff]
    %v126 = vld [vmem:[#allocation2 + $0x298] sm:$0xff]
    %v127 = vld [vmem:[#allocation2 + $0x2a0] sm:$0xff]
    %v128 = vld [vmem:[#allocation2 + $0x2a8] sm:$0xff]
    %v129 = vld [vmem:[#allocation2 + $0x2b0] sm:$0xff]
    %v130 = vld [vmem:[#allocation2 + $0x2b8] sm:$0xff]
    %v131 = vld [vmem:[#allocation2 + $0x2c0] sm:$0xff]
    %v132 = vld [vmem:[#allocation2 + $0x2c8] sm:$0xff]
    %v133 = vld [vmem:[#allocation2 + $0x2d0] sm:$0xff]
    %v134 = vld [vmem:[#allocation2 + $0x2d8] sm:$0xff]
    %v135 = vld [vmem:[#allocation2 + $0x2e0] sm:$0xff]
    %v136 = vld [vmem:[#allocation2 + $0x2e8] sm:$0xff]
    %v137 = vld [vmem:[#allocation2 + $0x2f0] sm:$0xff]
    %v138 = vld [vmem:[#allocation2 + $0x2f8] sm:$0xff]
    %v139 = vld [vmem:[#allocation2 + $0x300] sm:$0xff]
    %v140 = vld [vmem:[#allocation2 + $0x308] sm:$0xff]
    %v141 = vld [vmem:[#allocation2 + $0x310] sm:$0xff]
    %v142 = vld [vmem:[#allocation2 + $0x318] sm:$0xff]
    %v143 = vld [vmem:[#allocation2 + $0x320] sm:$0xff]
    %v144 = vld [vmem:[#allocation2 + $0x328] sm:$0xff]
    %v145 = vld [vmem:[#allocation2 + $0x330] sm:$0xff]
    %v146 = vld [vmem:[#allocation2 + $0x338] sm:$0xff]
    %v147 = vld [vmem:[#allocation2 + $0x340] sm:$0xff]
    %v148 = vld [vmem:[#allocation2 + $0x348] sm:$0xff]
    %v149 = vld [vmem:[#allocation2 + $0x350] sm:$0xff]
    %v150 = vld [vmem:[#allocation2 + $0x358] sm:$0xff]
    %v151 = vld [vmem:[#allocation2 + $0x360] sm:$0xff]
    %v152 = vld [vmem:[#allocation2 + $0x368] sm:$0xff]
    %v153 = vld [vmem:[#allocation2 + $0x370] sm:$0xff]
    %v154 = vld [vmem:[#allocation2 + $0x378] sm:$0xff]
    %v155 = vld [vmem:[#allocation2 + $0x380] sm:$0xff]
    %v156 = vld [vmem:[#allocation2 + $0x388] sm:$0xff]
    %v157 = vld [vmem:[#allocation2 + $0x390] sm:$0xff]
    %v158 = vld [vmem:[#allocation2 + $0x398] sm:$0xff]
    %v159 = vld [vmem:[#allocation2 + $0x3a0] sm:$0xff]
    %v160 = vld [vmem:[#allocation2 + $0x3a8] sm:$0xff]
    %v161 = vld [vmem:[#allocation2 + $0x3b0] sm:$0xff]
    %v162 = vld [vmem:[#allocation2 + $0x3b8] sm:$0xff]
    %v163 = vld [vmem:[#allocation2 + $0x3c0] sm:$0xff]
    %v164 = vld [vmem:[#allocation2 + $0x3c8] sm:$0xff]
    %v165 = vld [vmem:[#allocation2 + $0x3d0] sm:$0xff]
    %v166 = vld [vmem:[#allocation2 + $0x3d8] sm:$0xff]
    %v167 = vld [vmem:[#allocation2 + $0x3e0] sm:$0xff]
    %v168 = vld [vmem:[#allocation2 + $0x3e8] sm:$0xff]
    %v169 = vld [vmem:[#allocation2 + $0x3f0] sm:$0xff]
    %v170 = vld [vmem:[#allocation2 + $0x3f8] sm:$0xff]
    %v171 = vld [vmem:[#allocation2 + $0x400] sm:$0xff]
    %v172 = vld [vmem:[#allocation2 + $0x408] sm:$0xff]
    %v173 = vld [vmem:[#allocation2 + $0x410] sm:$0xff]
    %v174 = vld [vmem:[#allocation2 + $0x418] sm:$0xff]
    %v175 = vld [vmem:[#allocation2 + $0x420] sm:$0xff]
    %v176 = vld [vmem:[#allocation2 + $0x428] sm:$0xff]
    %v177 = vld [vmem:[#allocation2 + $0x430] sm:$0xff]
    %v178 = vld [vmem:[#allocation2 + $0x438] sm:$0xff]
    %v179 = vld [vmem:[#allocation2 + $0x440] sm:$0xff]
    %v180 = vld [vmem:[#allocation2 + $0x448] sm:$0xff]
    %v181 = vld [vmem:[#allocation2 + $0x450] sm:$0xff]
    %v182 = vld [vmem:[#allocation2 + $0x458] sm:$0xff]
    %v183 = vld [vmem:[#allocation2 + $0x460] sm:$0xff]
    %v184 = vld [vmem:[#allocation2 + $0x468] sm:$0xff]
    %v185 = vld [vmem:[#allocation2 + $0x470] sm:$0xff]
    %v186 = vld [vmem:[#allocation2 + $0x478] sm:$0xff]
    %v187 = vld [vmem:[#allocation2 + $0x480] sm:$0xff]
    %v188 = vld [vmem:[#allocation2 + $0x488] sm:$0xff]
    %v189 = vld [vmem:[#allocation2 + $0x490] sm:$0xff]
    %v190 = vld [vmem:[#allocation2 + $0x498] sm:$0xff]
    %v191 = vld [vmem:[#allocation2 + $0x4a0] sm:$0xff]
    %v192 = vld [vmem:[#allocation2 + $0x4a8] sm:$0xff]
    %v193 = vld [vmem:[#allocation2 + $0x4b0] sm:$0xff]
    %v194 = vld [vmem:[#allocation2 + $0x4b8] sm:$0xff]
    %v195 = vld [vmem:[#allocation2 + $0x4c0] sm:$0xff]
    %v196 = vld [vmem:[#allocation2 + $0x4c8] sm:$0xff]
    %v197 = vld [vmem:[#allocation2 + $0x4d0] sm:$0xff]
    %v198 = vld [vmem:[#allocation2 + $0x4d8] sm:$0xff]
    %v199 = vld [vmem:[#allocation2 + $0x4e0] sm:$0xff]
    %v200 = vld [vmem:[#allocation2 + $0x4e8] sm:$0xff]
    %v201 = vld [vmem:[#allocation2 + $0x4f0] sm:$0xff]
    %v202 = vld [vmem:[#allocation2 + $0x4f8] sm:$0xff]
    %v203 = vld [vmem:[#allocation2 + $0x500] sm:$0xff]
    %v204 = vld [vmem:[#allocation2 + $0x508] sm:$0xff]
    %v205 = vld [vmem:[#allocation2 + $0x510] sm:$0xff]
    %v206 = vld [vmem:[#allocation2 + $0x518] sm:$0xff]
    %v207 = vld [vmem:[#allocation2 + $0x520] sm:$0xff]
    %v208 = vld [vmem:[#allocation2 + $0x528] sm:$0xff]
    %v209 = vld [vmem:[#allocation2 + $0x530] sm:$0xff]
    %v210 = vld [vmem:[#allocation2 + $0x538] sm:$0xff]
    %v211 = vld [vmem:[#allocation2 + $0x540] sm:$0xff]
    %v212 = vld [vmem:[#allocation2 + $0x548] sm:$0xff]
    %v213 = vld [vmem:[#allocation2 + $0x550] sm:$0xff]
    %v214 = vld [vmem:[#allocation2 + $0x558] sm:$0xff]
    %v215 = vld [vmem:[#allocation2 + $0x560] sm:$0xff]
    %v216 = vld [vmem:[#allocation2 + $0x568] sm:$0xff]
    %v217 = vld [vmem:[#allocation2 + $0x570] sm:$0xff]
    %v218 = vld [vmem:[#allocation2 + $0x578] sm:$0xff]
    %v219 = vld [vmem:[#allocation2 + $0x580] sm:$0xff]
    %v220 = vld [vmem:[#allocation2 + $0x588] sm:$0xff]
    %v221 = vld [vmem:[#allocation2 + $0x590] sm:$0xff]
    %v222 = vld [vmem:[#allocation2 + $0x598] sm:$0xff]
    %v223 = vld [vmem:[#allocation2 + $0x5a0] sm:$0xff]
    %v224 = vld [vmem:[#allocation2 + $0x5a8] sm:$0xff]
    %v225 = vld [vmem:[#allocation2 + $0x5b0] sm:$0xff]
    %v226 = vld [vmem:[#allocation2 + $0x5b8] sm:$0xff]
    %v227 = vld [vmem:[#allocation2 + $0x5c0] sm:$0xff]
    %v228 = vld [vmem:[#allocation2 + $0x5c8] sm:$0xff]
    %v229 = vld [vmem:[#allocation2 + $0x5d0] sm:$0xff]
    %v230 = vld [vmem:[#allocation2 + $0x5d8] sm:$0xff]
    %v231 = vld [vmem:[#allocation2 + $0x5e0] sm:$0xff]
    %v232 = vld [vmem:[#allocation2 + $0x5e8] sm:$0xff]
    %v233 = vld [vmem:[#allocation2 + $0x5f0] sm:$0xff]
    %v234 = vld [vmem:[#allocation2 + $0x5f8] sm:$0xff]
    %v235 = vld [vmem:[#allocation2 + $0x600] sm:$0xff]
    %v236 = vld [vmem:[#allocation2 + $0x608] sm:$0xff]
    %v237 = vld [vmem:[#allocation2 + $0x610] sm:$0xff]
    %v238 = vld [vmem:[#allocation2 + $0x618] sm:$0xff]
    %v239 = vld [vmem:[#allocation2 + $0x620] sm:$0xff]
    %v240 = vld [vmem:[#allocation2 + $0x628] sm:$0xff]
    %v241 = vld [vmem:[#allocation2 + $0x630] sm:$0xff]
    %v242 = vld [vmem:[#allocation2 + $0x638] sm:$0xff]
    %v243 = vld [vmem:[#allocation2 + $0x640] sm:$0xff]
    %v244 = vld [vmem:[#allocation2 + $0x648] sm:$0xff]
    %v245 = vld [vmem:[#allocation2 + $0x650] sm:$0xff]
    %v246 = vld [vmem:[#allocation2 + $0x658] sm:$0xff]
    %v247 = vld [vmem:[#allocation2 + $0x660] sm:$0xff]
    %v248 = vld [vmem:[#allocation2 + $0x668] sm:$0xff]
    %v249 = vld [vmem:[#allocation2 + $0x670] sm:$0xff]
    %v250 = vld [vmem:[#allocation2 + $0x678] sm:$0xff]
    %v251 = vld [vmem:[#allocation2 + $0x680] sm:$0xff]
    %v252 = vld [vmem:[#allocation2 + $0x688] sm:$0xff]
    %v253 = vld [vmem:[#allocation2 + $0x690] sm:$0xff]
    %v254 = vld [vmem:[#allocation2 + $0x698] sm:$0xff]
    %v255 = vld [vmem:[#allocation2 + $0x6a0] sm:$0xff]
    %v256 = vld [vmem:[#allocation2 + $0x6a8] sm:$0xff]
    %v257 = vld [vmem:[#allocation2 + $0x6b0] sm:$0xff]
    %v258 = vld [vmem:[#allocation2 + $0x6b8] sm:$0xff]
    %v259 = vld [vmem:[#allocation2 + $0x6c0] sm:$0xff]
    %v260 = vld [vmem:[#allocation2 + $0x6c8] sm:$0xff]
    %v261 = vld [vmem:[#allocation2 + $0x6d0] sm:$0xff]
    %v262 = vld [vmem:[#allocation2 + $0x6d8] sm:$0xff]
    %v263 = vld [vmem:[#allocation2 + $0x6e0] sm:$0xff]
    %v264 = vld [vmem:[#allocation2 + $0x6e8] sm:$0xff]
    %v265 = vld [vmem:[#allocation2 + $0x6f0] sm:$0xff]
    %v266 = vld [vmem:[#allocation2 + $0x6f8] sm:$0xff]
    %v267 = vld [vmem:[#allocation2 + $0x700] sm:$0xff]
    %v268 = vld [vmem:[#allocation2 + $0x708] sm:$0xff]
    %v269 = vld [vmem:[#allocation2 + $0x710] sm:$0xff]
    %v270 = vld [vmem:[#allocation2 + $0x718] sm:$0xff]
    %v271 = vld [vmem:[#allocation2 + $0x720] sm:$0xff]
    %v272 = vld [vmem:[#allocation2 + $0x728] sm:$0xff]
    %v273 = vld [vmem:[#allocation2 + $0x730] sm:$0xff]
    %v274 = vld [vmem:[#allocation2 + $0x738] sm:$0xff]
    %v275 = vld [vmem:[#allocation2 + $0x740] sm:$0xff]
    %v276 = vld [vmem:[#allocation2 + $0x748] sm:$0xff]
    %v277 = vld [vmem:[#allocation2 + $0x750] sm:$0xff]
    %v278 = vld [vmem:[#allocation2 + $0x758] sm:$0xff]
    %v279 = vld [vmem:[#allocation2 + $0x760] sm:$0xff]
    %v280 = vld [vmem:[#allocation2 + $0x768] sm:$0xff]
    %v281 = vld [vmem:[#allocation2 + $0x770] sm:$0xff]
    %v282 = vld [vmem:[#allocation2 + $0x778] sm:$0xff]
    %v283 = vld [vmem:[#allocation2 + $0x780] sm:$0xff]
    %v284 = vld [vmem:[#allocation2 + $0x788] sm:$0xff]
    %v285 = vld [vmem:[#allocation2 + $0x790] sm:$0xff]
    %v286 = vld [vmem:[#allocation2 + $0x798] sm:$0xff]
    %v287 = vld [vmem:[#allocation2 + $0x7a0] sm:$0xff]
    %v288 = vld [vmem:[#allocation2 + $0x7a8] sm:$0xff]
    %v289 = vld [vmem:[#allocation2 + $0x7b0] sm:$0xff]
    %v290 = vld [vmem:[#allocation2 + $0x7b8] sm:$0xff]
    %v291 = vld [vmem:[#allocation2 + $0x7c0] sm:$0xff]
    %v292 = vld [vmem:[#allocation2 + $0x7c8] sm:$0xff]
    %v293 = vld [vmem:[#allocation2 + $0x7d0] sm:$0xff]
    %v294 = vld [vmem:[#allocation2 + $0x7d8] sm:$0xff]
    %v295 = vld [vmem:[#allocation2 + $0x7e0] sm:$0xff]
    %v296 = vld [vmem:[#allocation2 + $0x7e8] sm:$0xff]
    %v297 = vld [vmem:[#allocation2 + $0x7f0] sm:$0xff]
    %v298 = vld [vmem:[#allocation2 + $0x7f8] sm:$0xff]
    %v299 = vld [vmem:[#allocation2 + $0x800] sm:$0xff]
    %v300 = vld [vmem:[#allocation2 + $0x808] sm:$0xff]
    %v301 = vld [vmem:[#allocation2 + $0x810] sm:$0xff]
    %v302 = vld [vmem:[#allocation2 + $0x818] sm:$0xff]
    %v303 = vld [vmem:[#allocation2 + $0x820] sm:$0xff]
    %v304 = vld [vmem:[#allocation2 + $0x828] sm:$0xff]
    %v305 = vld [vmem:[#allocation2 + $0x830] sm:$0xff]
    %v306 = vld [vmem:[#allocation2 + $0x838] sm:$0xff]
    %v307 = vld [vmem:[#allocation2 + $0x840] sm:$0xff]
    %v308 = vld [vmem:[#allocation2 + $0x848] sm:$0xff]
    %v309 = vld [vmem:[#allocation2 + $0x850] sm:$0xff]
    %v310 = vld [vmem:[#allocation2 + $0x858] sm:$0xff]
    %v311 = vld [vmem:[#allocation2 + $0x860] sm:$0xff]
    %v312 = vld [vmem:[#allocation2 + $0x868] sm:$0xff]
    %v313 = vld [vmem:[#allocation2 + $0x870] sm:$0xff]
    %v314 = vld [vmem:[#allocation2 + $0x878] sm:$0xff]
    %v315 = vld [vmem:[#allocation2 + $0x880] sm:$0xff]
    %v316 = vld [vmem:[#allocation2 + $0x888] sm:$0xff]
    %v317 = vld [vmem:[#allocation2 + $0x890] sm:$0xff]
    %v318 = vld [vmem:[#allocation2 + $0x898] sm:$0xff]
    %v319 = vld [vmem:[#allocation2 + $0x8a0] sm:$0xff]
    %v320 = vld [vmem:[#allocation2 + $0x8a8] sm:$0xff]
    %v321 = vld [vmem:[#allocation2 + $0x8b0] sm:$0xff]
    %v322 = vld [vmem:[#allocation2 + $0x8b8] sm:$0xff]
    %v323 = vld [vmem:[#allocation2 + $0x8c0] sm:$0xff]
    %v324 = vld [vmem:[#allocation2 + $0x8c8] sm:$0xff]
    %v325 = vld [vmem:[#allocation2 + $0x8d0] sm:$0xff]
    %v326 = vld [vmem:[#allocation2 + $0x8d8] sm:$0xff]
    %v327 = vld [vmem:[#allocation2 + $0x8e0] sm:$0xff]
    %v328 = vld [vmem:[#allocation2 + $0x8e8] sm:$0xff]
    %v329 = vld [vmem:[#allocation2 + $0x8f0] sm:$0xff]
    %v330 = vld [vmem:[#allocation2 + $0x8f8] sm:$0xff]
    %v331 = vld [vmem:[#allocation2 + $0x900] sm:$0xff]
    %v332 = vld [vmem:[#allocation2 + $0x908] sm:$0xff]
    %v333 = vld [vmem:[#allocation2 + $0x910] sm:$0xff]
    %v334 = vld [vmem:[#allocation2 + $0x918] sm:$0xff]
    %v335 = vld [vmem:[#allocation2 + $0x920] sm:$0xff]
    %v336 = vld [vmem:[#allocation2 + $0x928] sm:$0xff]
    %v337 = vld [vmem:[#allocation2 + $0x930] sm:$0xff]
    %v338 = vld [vmem:[#allocation2 + $0x938] sm:$0xff]
    %v339 = vld [vmem:[#allocation2 + $0x940] sm:$0xff]
    %v340 = vld [vmem:[#allocation2 + $0x948] sm:$0xff]
    %v341 = vld [vmem:[#allocation2 + $0x950] sm:$0xff]
    %v342 = vld [vmem:[#allocation2 + $0x958] sm:$0xff]
    %v343 = vld [vmem:[#allocation2 + $0x960] sm:$0xff]
    %v344 = vld [vmem:[#allocation2 + $0x968] sm:$0xff]
    %v345 = vld [vmem:[#allocation2 + $0x970] sm:$0xff]
    %v346 = vld [vmem:[#allocation2 + $0x978] sm:$0xff]
    %v347 = vld [vmem:[#allocation2 + $0x980] sm:$0xff]
    %v348 = vld [vmem:[#allocation2 + $0x988] sm:$0xff]
    %v349 = vld [vmem:[#allocation2 + $0x990] sm:$0xff]
    %v350 = vld [vmem:[#allocation2 + $0x998] sm:$0xff]
    %v351 = vld [vmem:[#allocation2 + $0x9a0] sm:$0xff]
    %v352 = vld [vmem:[#allocation2 + $0x9a8] sm:$0xff]
    %v353 = vld [vmem:[#allocation2 + $0x9b0] sm:$0xff]
    %v354 = vld [vmem:[#allocation2 + $0x9b8] sm:$0xff]
    %v355 = vld [vmem:[#allocation2 + $0x9c0] sm:$0xff]
    %v356 = vld [vmem:[#allocation2 + $0x9c8] sm:$0xff]
    %v357 = vld [vmem:[#allocation2 + $0x9d0] sm:$0xff]
    %v358 = vld [vmem:[#allocation2 + $0x9d8] sm:$0xff]
    %v359 = vld [vmem:[#allocation2 + $0x9e0] sm:$0xff]
    %v360 = vld [vmem:[#allocation2 + $0x9e8] sm:$0xff]
    %v361 = vld [vmem:[#allocation2 + $0x9f0] sm:$0xff]
    %v362 = vld [vmem:[#allocation2 + $0x9f8] sm:$0xff]
    %v363 = vld [vmem:[#allocation2 + $0xa00] sm:$0xff]
    %v364 = vld [vmem:[#allocation2 + $0xa08] sm:$0xff]
    %v365 = vld [vmem:[#allocation2 + $0xa10] sm:$0xff]
    %v366 = vld [vmem:[#allocation2 + $0xa18] sm:$0xff]
    %v367 = vld [vmem:[#allocation2 + $0xa20] sm:$0xff]
    %v368 = vld [vmem:[#allocation2 + $0xa28] sm:$0xff]
    %v369 = vld [vmem:[#allocation2 + $0xa30] sm:$0xff]
    %v370 = vld [vmem:[#allocation2 + $0xa38] sm:$0xff]
    %v371 = vld [vmem:[#allocation2 + $0xa40] sm:$0xff]
    %v372 = vld [vmem:[#allocation2 + $0xa48] sm:$0xff]
    %v373 = vld [vmem:[#allocation2 + $0xa50] sm:$0xff]
    %v374 = vld [vmem:[#allocation2 + $0xa58] sm:$0xff]
    %v375 = vld [vmem:[#allocation2 + $0xa60] sm:$0xff]
    %v376 = vld [vmem:[#allocation2 + $0xa68] sm:$0xff]
    %v377 = vld [vmem:[#allocation2 + $0xa70] sm:$0xff]
    %v378 = vld [vmem:[#allocation2 + $0xa78] sm:$0xff]
    %v379 = vld [vmem:[#allocation2 + $0xa80] sm:$0xff]
    %v380 = vld [vmem:[#allocation2 + $0xa88] sm:$0xff]
    %v381 = vld [vmem:[#allocation2 + $0xa90] sm:$0xff]
    %v382 = vld [vmem:[#allocation2 + $0xa98] sm:$0xff]
    %v383 = vld [vmem:[#allocation2 + $0xaa0] sm:$0xff]
    %v384 = vld [vmem:[#allocation2 + $0xaa8] sm:$0xff]
    %v385 = vld [vmem:[#allocation2 + $0xab0] sm:$0xff]
    %v386 = vld [vmem:[#allocation2 + $0xab8] sm:$0xff]
    %v387 = vld [vmem:[#allocation2 + $0xac0] sm:$0xff]
    %v388 = vld [vmem:[#allocation2 + $0xac8] sm:$0xff]
    %v389 = vld [vmem:[#allocation2 + $0xad0] sm:$0xff]
    %v390 = vld [vmem:[#allocation2 + $0xad8] sm:$0xff]
    %v391 = vld [vmem:[#allocation2 + $0xae0] sm:$0xff]
    %v392 = vld [vmem:[#allocation2 + $0xae8] sm:$0xff]
    %v393 = vld [vmem:[#allocation2 + $0xaf0] sm:$0xff]
    %v394 = vld [vmem:[#allocation2 + $0xaf8] sm:$0xff]
    %v395 = vld [vmem:[#allocation2 + $0xb00] sm:$0xff]
    %v396 = vld [vmem:[#allocation2 + $0xb08] sm:$0xff]
    %v397 = vld [vmem:[#allocation2 + $0xb10] sm:$0xff]
    %v398 = vld [vmem:[#allocation2 + $0xb18] sm:$0xff]
    %v399 = vld [vmem:[#allocation2 + $0xb20] sm:$0xff]
    %v400 = vld [vmem:[#allocation2 + $0xb28] sm:$0xff]
    %v401 = vld [vmem:[#allocation2 + $0xb30] sm:$0xff]
    %v402 = vld [vmem:[#allocation2 + $0xb38] sm:$0xff]
    %v403 = vld [vmem:[#allocation2 + $0xb40] sm:$0xff]
    %v404 = vld [vmem:[#allocation2 + $0xb48] sm:$0xff]
    %v405 = vld [vmem:[#allocation2 + $0xb50] sm:$0xff]
    %v406 = vld [vmem:[#allocation2 + $0xb58] sm:$0xff]
    %v407 = vld [vmem:[#allocation2 + $0xb60] sm:$0xff]
    %v408 = vld [vmem:[#allocation2 + $0xb68] sm:$0xff]
    %v409 = vld [vmem:[#allocation2 + $0xb70] sm:$0xff]
    %v410 = vld [vmem:[#allocation2 + $0xb78] sm:$0xff]
    %v411 = vld [vmem:[#allocation2 + $0xb80] sm:$0xff]
    %v412 = vld [vmem:[#allocation2 + $0xb88] sm:$0xff]
    %v413 = vld [vmem:[#allocation2 + $0xb90] sm:$0xff]
    %v414 = vld [vmem:[#allocation2 + $0xb98] sm:$0xff]
    %v415 = vld [vmem:[#allocation2 + $0xba0] sm:$0xff]
    %v416 = vld [vmem:[#allocation2 + $0xba8] sm:$0xff]
    %v417 = vld [vmem:[#allocation2 + $0xbb0] sm:$0xff]
    %v418 = vld [vmem:[#allocation2 + $0xbb8] sm:$0xff]
    %v419 = vld [vmem:[#allocation2 + $0xbc0] sm:$0xff]
    %v420 = vld [vmem:[#allocation2 + $0xbc8] sm:$0xff]
    %v421 = vld [vmem:[#allocation2 + $0xbd0] sm:$0xff]
    %v422 = vld [vmem:[#allocation2 + $0xbd8] sm:$0xff]
    %v423 = vld [vmem:[#allocation2 + $0xbe0] sm:$0xff]
    %v424 = vld [vmem:[#allocation2 + $0xbe8] sm:$0xff]
    %v425 = vld [vmem:[#allocation2 + $0xbf0] sm:$0xff]
    %v426 = vld [vmem:[#allocation2 + $0xbf8] sm:$0xff]
    %v427 = vld [vmem:[#allocation2 + $0xc00] sm:$0xff]
    %v428 = vld [vmem:[#allocation2 + $0xc08] sm:$0xff]
    %v429 = vld [vmem:[#allocation2 + $0xc10] sm:$0xff]
    %v430 = vld [vmem:[#allocation2 + $0xc18] sm:$0xff]
    %v431 = vld [vmem:[#allocation2 + $0xc20] sm:$0xff]
    %v432 = vld [vmem:[#allocation2 + $0xc28] sm:$0xff]
    %v433 = vld [vmem:[#allocation2 + $0xc30] sm:$0xff]
    %v434 = vld [vmem:[#allocation2 + $0xc38] sm:$0xff]
    %v435 = vld [vmem:[#allocation2 + $0xc40] sm:$0xff]
    %v436 = vld [vmem:[#allocation2 + $0xc48] sm:$0xff]
    %v437 = vld [vmem:[#allocation2 + $0xc50] sm:$0xff]
    %v438 = vld [vmem:[#allocation2 + $0xc58] sm:$0xff]
    %v439 = vld [vmem:[#allocation2 + $0xc60] sm:$0xff]
    %v440 = vld [vmem:[#allocation2 + $0xc68] sm:$0xff]
    %v441 = vld [vmem:[#allocation2 + $0xc70] sm:$0xff]
    %v442 = vld [vmem:[#allocation2 + $0xc78] sm:$0xff]
    %v443 = vld [vmem:[#allocation2 + $0xc80] sm:$0xff]
    %v444 = vld [vmem:[#allocation2 + $0xc88] sm:$0xff]
    %v445 = vld [vmem:[#allocation2 + $0xc90] sm:$0xff]
    %v446 = vld [vmem:[#allocation2 + $0xc98] sm:$0xff]
    %v447 = vld [vmem:[#allocation2 + $0xca0] sm:$0xff]
    %v448 = vld [vmem:[#allocation2 + $0xca8] sm:$0xff]
    %v449 = vld [vmem:[#allocation2 + $0xcb0] sm:$0xff]
    %v450 = vld [vmem:[#allocation2 + $0xcb8] sm:$0xff]
    %v451 = vld [vmem:[#allocation2 + $0xcc0] sm:$0xff]
    %v452 = vld [vmem:[#allocation2 + $0xcc8] sm:$0xff]
    %v453 = vld [vmem:[#allocation2 + $0xcd0] sm:$0xff]
    %v454 = vld [vmem:[#allocation2 + $0xcd8] sm:$0xff]
    %v455 = vld [vmem:[#allocation2 + $0xce0] sm:$0xff]
    %v456 = vld [vmem:[#allocation2 + $0xce8] sm:$0xff]
    %v457 = vld [vmem:[#allocation2 + $0xcf0] sm:$0xff]
    %v458 = vld [vmem:[#allocation2 + $0xcf8] sm:$0xff]
    %v459 = vld [vmem:[#allocation2 + $0xd00] sm:$0xff]
    %v460 = vld [vmem:[#allocation2 + $0xd08] sm:$0xff]
    %v461 = vld [vmem:[#allocation2 + $0xd10] sm:$0xff]
    %v462 = vld [vmem:[#allocation2 + $0xd18] sm:$0xff]
    %v463 = vld [vmem:[#allocation2 + $0xd20] sm:$0xff]
    %v464 = vld [vmem:[#allocation2 + $0xd28] sm:$0xff]
    %v465 = vld [vmem:[#allocation2 + $0xd30] sm:$0xff]
    %v466 = vld [vmem:[#allocation2 + $0xd38] sm:$0xff]
    %v467 = vld [vmem:[#allocation2 + $0xd40] sm:$0xff]
    %v468 = vld [vmem:[#allocation2 + $0xd48] sm:$0xff]
    %v469 = vld [vmem:[#allocation2 + $0xd50] sm:$0xff]
    %v470 = vld [vmem:[#allocation2 + $0xd58] sm:$0xff]
    %v471 = vld [vmem:[#allocation2 + $0xd60] sm:$0xff]
    %v472 = vld [vmem:[#allocation2 + $0xd68] sm:$0xff]
    %v473 = vld [vmem:[#allocation2 + $0xd70] sm:$0xff]
    %v474 = vld [vmem:[#allocation2 + $0xd78] sm:$0xff]
    %v475 = vld [vmem:[#allocation2 + $0xd80] sm:$0xff]
    %v476 = vld [vmem:[#allocation2 + $0xd88] sm:$0xff]
    %v477 = vld [vmem:[#allocation2 + $0xd90] sm:$0xff]
    %v478 = vld [vmem:[#allocation2 + $0xd98] sm:$0xff]
    %v479 = vld [vmem:[#allocation2 + $0xda0] sm:$0xff]
    %v480 = vld [vmem:[#allocation2 + $0xda8] sm:$0xff]
    %v481 = vld [vmem:[#allocation2 + $0xdb0] sm:$0xff]
    %v482 = vld [vmem:[#allocation2 + $0xdb8] sm:$0xff]
    %v483 = vld [vmem:[#allocation2 + $0xdc0] sm:$0xff]
    %v484 = vld [vmem:[#allocation2 + $0xdc8] sm:$0xff]
    %v485 = vld [vmem:[#allocation2 + $0xdd0] sm:$0xff]
    %v486 = vld [vmem:[#allocation2 + $0xdd8] sm:$0xff]
    %v487 = vld [vmem:[#allocation2 + $0xde0] sm:$0xff]
    %v488 = vld [vmem:[#allocation2 + $0xde8] sm:$0xff]
    %v489 = vld [vmem:[#allocation2 + $0xdf0] sm:$0xff]
    %v490 = vld [vmem:[#allocation2 + $0xdf8] sm:$0xff]
    %v491 = vld [vmem:[#allocation2 + $0xe00] sm:$0xff]
    %v492 = vld [vmem:[#allocation2 + $0xe08] sm:$0xff]
    %v493 = vld [vmem:[#allocation2 + $0xe10] sm:$0xff]
    %v494 = vld [vmem:[#allocation2 + $0xe18] sm:$0xff]
    %v495 = vld [vmem:[#allocation2 + $0xe20] sm:$0xff]
    %v496 = vld [vmem:[#allocation2 + $0xe28] sm:$0xff]
    %v497 = vld [vmem:[#allocation2 + $0xe30] sm:$0xff]
    %v498 = vld [vmem:[#allocation2 + $0xe38] sm:$0xff]
    %v499 = vld [vmem:[#allocation2 + $0xe40] sm:$0xff]
    %v500 = vld [vmem:[#allocation2 + $0xe48] sm:$0xff]
    %v501 = vld [vmem:[#allocation2 + $0xe50] sm:$0xff]
    %v502 = vld [vmem:[#allocation2 + $0xe58] sm:$0xff]
    %v503 = vld [vmem:[#allocation2 + $0xe60] sm:$0xff]
    %v504 = vld [vmem:[#allocation2 + $0xe68] sm:$0xff]
    %v505 = vld [vmem:[#allocation2 + $0xe70] sm:$0xff]
    %v506 = vld [vmem:[#allocation2 + $0xe78] sm:$0xff]
    %v507 = vld [vmem:[#allocation2 + $0xe80] sm:$0xff]
    %v508 = vld [vmem:[#allocation2 + $0xe88] sm:$0xff]
    %v509 = vld [vmem:[#allocation2 + $0xe90] sm:$0xff]
    %v510 = vld [vmem:[#allocation2 + $0xe98] sm:$0xff]
    %v511 = vld [vmem:[#allocation2 + $0xea0] sm:$0xff]
    %v512 = vld [vmem:[#allocation2 + $0xea8] sm:$0xff]
    %v513 = vld [vmem:[#allocation2 + $0xeb0] sm:$0xff]
    %v514 = vld [vmem:[#allocation2 + $0xeb8] sm:$0xff]
    %v515 = vld [vmem:[#allocation2 + $0xec0] sm:$0xff]
    %v516 = vld [vmem:[#allocation2 + $0xec8] sm:$0xff]
    %v517 = vld [vmem:[#allocation2 + $0xed0] sm:$0xff]
    %v518 = vld [vmem:[#allocation2 + $0xed8] sm:$0xff]
    %v519 = vld [vmem:[#allocation2 + $0xee0] sm:$0xff]
    %v520 = vld [vmem:[#allocation2 + $0xee8] sm:$0xff]
    %v521 = vld [vmem:[#allocation2 + $0xef0] sm:$0xff]
    %v522 = vld [vmem:[#allocation2 + $0xef8] sm:$0xff]
    %v523 = vld [vmem:[#allocation2 + $0xf00] sm:$0xff]
    %v524 = vld [vmem:[#allocation2 + $0xf08] sm:$0xff]
    %v525 = vld [vmem:[#allocation2 + $0xf10] sm:$0xff]
    %v526 = vld [vmem:[#allocation2 + $0xf18] sm:$0xff]
    %v527 = vld [vmem:[#allocation2 + $0xf20] sm:$0xff]
    %v528 = vld [vmem:[#allocation2 + $0xf28] sm:$0xff]
    %v529 = vld [vmem:[#allocation2 + $0xf30] sm:$0xff]
    %v530 = vld [vmem:[#allocation2 + $0xf38] sm:$0xff]
    %v531 = vld [vmem:[#allocation2 + $0xf40] sm:$0xff]
    %v532 = vld [vmem:[#allocation2 + $0xf48] sm:$0xff]
    %v533 = vld [vmem:[#allocation2 + $0xf50] sm:$0xff]
    %v534 = vld [vmem:[#allocation2 + $0xf58] sm:$0xff]
    %v535 = vld [vmem:[#allocation2 + $0xf60] sm:$0xff]
    %v536 = vld [vmem:[#allocation2 + $0xf68] sm:$0xff]
    %v537 = vld [vmem:[#allocation2 + $0xf70] sm:$0xff]
    %v538 = vld [vmem:[#allocation2 + $0xf78] sm:$0xff]
    %v539 = vld [vmem:[#allocation2 + $0xf80] sm:$0xff]
    %v540 = vld [vmem:[#allocation2 + $0xf88] sm:$0xff]
    %v541 = vld [vmem:[#allocation2 + $0xf90] sm:$0xff]
    %v542 = vld [vmem:[#allocation2 + $0xf98] sm:$0xff]
    %v543 = vld [vmem:[#allocation2 + $0xfa0] sm:$0xff]
    %v544 = vld [vmem:[#allocation2 + $0xfa8] sm:$0xff]
    %v545 = vld [vmem:[#allocation2 + $0xfb0] sm:$0xff]
    %v546 = vld [vmem:[#allocation2 + $0xfb8] sm:$0xff]
    %v547 = vld [vmem:[#allocation2 + $0xfc0] sm:$0xff]
    %v548 = vld [vmem:[#allocation2 + $0xfc8] sm:$0xff]
    %v549 = vld [vmem:[#allocation2 + $0xfd0] sm:$0xff]
    %v550 = vld [vmem:[#allocation2 + $0xfd8] sm:$0xff]
    %v551 = vld [vmem:[#allocation2 + $0xfe0] sm:$0xff]
    %v552 = vld [vmem:[#allocation2 + $0xfe8] sm:$0xff]
    %v553 = vld [vmem:[#allocation2 + $0xff0] sm:$0xff]
    %v554 = vld [vmem:[#allocation2 + $0xff8] sm:$0xff]
    %v555 = vld [vmem:[#allocation2 + $0x1000] sm:$0xff]
    %v556 = vld [vmem:[#allocation2 + $0x1008] sm:$0xff]
    %v557 = vld [vmem:[#allocation2 + $0x1010] sm:$0xff]
    %v558 = vld [vmem:[#allocation2 + $0x1018] sm:$0xff]
    %v559 = vld [vmem:[#allocation2 + $0x1020] sm:$0xff]
    %v560 = vld [vmem:[#allocation2 + $0x1028] sm:$0xff]
    %v561 = vld [vmem:[#allocation2 + $0x1030] sm:$0xff]
    %v562 = vld [vmem:[#allocation2 + $0x1038] sm:$0xff]
    %v563 = vld [vmem:[#allocation2 + $0x1040] sm:$0xff]
    %v564 = vld [vmem:[#allocation2 + $0x1048] sm:$0xff]
    %v565 = vld [vmem:[#allocation2 + $0x1050] sm:$0xff]
    %v566 = vld [vmem:[#allocation2 + $0x1058] sm:$0xff]
    %v567 = vld [vmem:[#allocation2 + $0x1060] sm:$0xff]
    %v568 = vld [vmem:[#allocation2 + $0x1068] sm:$0xff]
    %v569 = vld [vmem:[#allocation2 + $0x1070] sm:$0xff]
    %v570 = vld [vmem:[#allocation2 + $0x1078] sm:$0xff]
    %v571 = vld [vmem:[#allocation2 + $0x1080] sm:$0xff]
    %v572 = vld [vmem:[#allocation2 + $0x1088] sm:$0xff]
    %v573 = vld [vmem:[#allocation2 + $0x1090] sm:$0xff]
    %v574 = vld [vmem:[#allocation2 + $0x1098] sm:$0xff]
    %v575 = vld [vmem:[#allocation2 + $0x10a0] sm:$0xff]
    %v576 = vld [vmem:[#allocation2 + $0x10a8] sm:$0xff]
    %v577 = vld [vmem:[#allocation2 + $0x10b0] sm:$0xff]
    %v578 = vld [vmem:[#allocation2 + $0x10b8] sm:$0xff]
    %v579 = vld [vmem:[#allocation2 + $0x10c0] sm:$0xff]
    %v580 = vld [vmem:[#allocation2 + $0x10c8] sm:$0xff]
    %v581 = vld [vmem:[#allocation2 + $0x10d0] sm:$0xff]
    %v582 = vld [vmem:[#allocation2 + $0x10d8] sm:$0xff]
    %v583 = vld [vmem:[#allocation2 + $0x10e0] sm:$0xff]
    %v584 = vld [vmem:[#allocation2 + $0x10e8] sm:$0xff]
    %v585 = vld [vmem:[#allocation2 + $0x10f0] sm:$0xff]
    %v586 = vld [vmem:[#allocation2 + $0x10f8] sm:$0xff]
    %v587 = vld [vmem:[#allocation2 + $0x1100] sm:$0xff]
    %v588 = vld [vmem:[#allocation2 + $0x1108] sm:$0xff]
    %v589 = vld [vmem:[#allocation2 + $0x1110] sm:$0xff]
    %v590 = vld [vmem:[#allocation2 + $0x1118] sm:$0xff]
    %v591 = vld [vmem:[#allocation2 + $0x1120] sm:$0xff]
    %v592 = vld [vmem:[#allocation2 + $0x1128] sm:$0xff]
    %v593 = vld [vmem:[#allocation2 + $0x1130] sm:$0xff]
    %v594 = vld [vmem:[#allocation2 + $0x1138] sm:$0xff]
    %v595 = vld [vmem:[#allocation2 + $0x1140] sm:$0xff]
    %v596 = vld [vmem:[#allocation2 + $0x1148] sm:$0xff]
    %v597 = vld [vmem:[#allocation2 + $0x1150] sm:$0xff]
    %v598 = vld [vmem:[#allocation2 + $0x1158] sm:$0xff]
    %v599 = vld [vmem:[#allocation2 + $0x1160] sm:$0xff]
    %v600 = vld [vmem:[#allocation2 + $0x1168] sm:$0xff]
    %v601 = vld [vmem:[#allocation2 + $0x1170] sm:$0xff]
    %v602 = vld [vmem:[#allocation2 + $0x1178] sm:$0xff]
    %v603 = vld [vmem:[#allocation2 + $0x1180] sm:$0xff]
    %v604 = vld [vmem:[#allocation2 + $0x1188] sm:$0xff]
    %v605 = vld [vmem:[#allocation2 + $0x1190] sm:$0xff]
    %v606 = vld [vmem:[#allocation2 + $0x1198] sm:$0xff]
    %v607 = vld [vmem:[#allocation2 + $0x11a0] sm:$0xff]
    %v608 = vld [vmem:[#allocation2 + $0x11a8] sm:$0xff]
    %v609 = vld [vmem:[#allocation2 + $0x11b0] sm:$0xff]
    %v610 = vld [vmem:[#allocation2 + $0x11b8] sm:$0xff]
    %v611 = vld [vmem:[#allocation2 + $0x11c0] sm:$0xff]
    %v612 = vld [vmem:[#allocation2 + $0x11c8] sm:$0xff]
    %v613 = vld [vmem:[#allocation2 + $0x11d0] sm:$0xff]
    %v614 = vld [vmem:[#allocation2 + $0x11d8] sm:$0xff]
    %v615 = vld [vmem:[#allocation2 + $0x11e0] sm:$0xff]
    %v616 = vld [vmem:[#allocation2 + $0x11e8] sm:$0xff]
    %v617 = vld [vmem:[#allocation2 + $0x11f0] sm:$0xff]
    %v618 = vld [vmem:[#allocation2 + $0x11f8] sm:$0xff]
    %v619 = vld [vmem:[#allocation2 + $0x1200] sm:$0xff]
    %v620 = vld [vmem:[#allocation2 + $0x1208] sm:$0xff]
    %v621 = vld [vmem:[#allocation2 + $0x1210] sm:$0xff]
    %v622 = vld [vmem:[#allocation2 + $0x1218] sm:$0xff]
    %v623 = vld [vmem:[#allocation2 + $0x1220] sm:$0xff]
    %v624 = vld [vmem:[#allocation2 + $0x1228] sm:$0xff]
    %v625 = vld [vmem:[#allocation2 + $0x1230] sm:$0xff]
    %v626 = vld [vmem:[#allocation2 + $0x1238] sm:$0xff]
    %v627 = vld [vmem:[#allocation2 + $0x1240] sm:$0xff]
    %v628 = vld [vmem:[#allocation2 + $0x1248] sm:$0xff]
    %v629 = vld [vmem:[#allocation2 + $0x1250] sm:$0xff]
    %v630 = vld [vmem:[#allocation2 + $0x1258] sm:$0xff]
    %v631 = vld [vmem:[#allocation2 + $0x1260] sm:$0xff]
    %v632 = vld [vmem:[#allocation2 + $0x1268] sm:$0xff]
    %v633 = vld [vmem:[#allocation2 + $0x1270] sm:$0xff]
    %v634 = vld [vmem:[#allocation2 + $0x1278] sm:$0xff]
    %v635 = vld [vmem:[#allocation2 + $0x1280] sm:$0xff]
    %v636 = vld [vmem:[#allocation2 + $0x1288] sm:$0xff]
    %v637 = vld [vmem:[#allocation2 + $0x1290] sm:$0xff]
    %v638 = vld [vmem:[#allocation2 + $0x1298] sm:$0xff]
    %v639 = vld [vmem:[#allocation2 + $0x12a0] sm:$0xff]
    %v640 = vld [vmem:[#allocation2 + $0x12a8] sm:$0xff]
    %v641 = vld [vmem:[#allocation2 + $0x12b0] sm:$0xff]
    %v642 = vld [vmem:[#allocation2 + $0x12b8] sm:$0xff]
    %v643 = vld [vmem:[#allocation2 + $0x12c0] sm:$0xff]
    %v644 = vld [vmem:[#allocation2 + $0x12c8] sm:$0xff]
    %v645 = vld [vmem:[#allocation2 + $0x12d0] sm:$0xff]
    %v646 = vld [vmem:[#allocation2 + $0x12d8] sm:$0xff]
    %v647 = vld [vmem:[#allocation2 + $0x12e0] sm:$0xff]
    %v648 = vld [vmem:[#allocation2 + $0x12e8] sm:$0xff]
    %v649 = vld [vmem:[#allocation2 + $0x12f0] sm:$0xff]
    %v650 = vld [vmem:[#allocation2 + $0x12f8] sm:$0xff]
    %v651 = vld [vmem:[#allocation2 + $0x1300] sm:$0xff]
    %v652 = vld [vmem:[#allocation2 + $0x1308] sm:$0xff]
    %v653 = vld [vmem:[#allocation2 + $0x1310] sm:$0xff]
    %v654 = vld [vmem:[#allocation2 + $0x1318] sm:$0xff]
    %v655 = vld [vmem:[#allocation2 + $0x1320] sm:$0xff]
    %v656 = vld [vmem:[#allocation2 + $0x1328] sm:$0xff]
    %v657 = vld [vmem:[#allocation2 + $0x1330] sm:$0xff]
    %v658 = vld [vmem:[#allocation2 + $0x1338] sm:$0xff]
    %v659 = vld [vmem:[#allocation2 + $0x1340] sm:$0xff]
    %v660 = vld [vmem:[#allocation2 + $0x1348] sm:$0xff]
    %v661 = vld [vmem:[#allocation2 + $0x1350] sm:$0xff]
    %v662 = vld [vmem:[#allocation2 + $0x1358] sm:$0xff]
    %v663 = vld [vmem:[#allocation2 + $0x1360] sm:$0xff]
    %v664 = vld [vmem:[#allocation2 + $0x1368] sm:$0xff]
    %v665 = vld [vmem:[#allocation2 + $0x1370] sm:$0xff]
    %v666 = vld [vmem:[#allocation2 + $0x1378] sm:$0xff]
    %v667 = vld [vmem:[#allocation2 + $0x1380] sm:$0xff]
    %v668 = vld [vmem:[#allocation2 + $0x1388] sm:$0xff]
    %v669 = vld [vmem:[#allocation2 + $0x1390] sm:$0xff]
    %v670 = vld [vmem:[#allocation2 + $0x1398] sm:$0xff]
    %v671 = vld [vmem:[#allocation2 + $0x13a0] sm:$0xff]
    %v672 = vld [vmem:[#allocation2 + $0x13a8] sm:$0xff]
    %v673 = vld [vmem:[#allocation2 + $0x13b0] sm:$0xff]
    %v674 = vld [vmem:[#allocation2 + $0x13b8] sm:$0xff]
    %v675 = vld [vmem:[#allocation2 + $0x13c0] sm:$0xff]
    %v676 = vld [vmem:[#allocation2 + $0x13c8] sm:$0xff]
    %v677 = vld [vmem:[#allocation2 + $0x13d0] sm:$0xff]
    %v678 = vld [vmem:[#allocation2 + $0x13d8] sm:$0xff]
    %v679 = vld [vmem:[#allocation2 + $0x13e0] sm:$0xff]
    %v680 = vld [vmem:[#allocation2 + $0x13e8] sm:$0xff]
    %v681 = vld [vmem:[#allocation2 + $0x13f0] sm:$0xff]
    %v682 = vld [vmem:[#allocation2 + $0x13f8] sm:$0xff]
    %v683 = vld [vmem:[#allocation2 + $0x1400] sm:$0xff]
    %v684 = vld [vmem:[#allocation2 + $0x1408] sm:$0xff]
    %v685 = vld [vmem:[#allocation2 + $0x1410] sm:$0xff]
    %v686 = vld [vmem:[#allocation2 + $0x1418] sm:$0xff]
    %v687 = vld [vmem:[#allocation2 + $0x1420] sm:$0xff]
    %v688 = vld [vmem:[#allocation2 + $0x1428] sm:$0xff]
    %v689 = vld [vmem:[#allocation2 + $0x1430] sm:$0xff]
    %v690 = vld [vmem:[#allocation2 + $0x1438] sm:$0xff]
    %v691 = vld [vmem:[#allocation2 + $0x1440] sm:$0xff]
    %v692 = vld [vmem:[#allocation2 + $0x1448] sm:$0xff]
    %v693 = vld [vmem:[#allocation2 + $0x1450] sm:$0xff]
    %v694 = vld [vmem:[#allocation2 + $0x1458] sm:$0xff]
    %v695 = vld [vmem:[#allocation2 + $0x1460] sm:$0xff]
    %v696 = vld [vmem:[#allocation2 + $0x1468] sm:$0xff]
    %v697 = vld [vmem:[#allocation2 + $0x1470] sm:$0xff]
    %v698 = vld [vmem:[#allocation2 + $0x1478] sm:$0xff]
    %v699 = vld [vmem:[#allocation2 + $0x1480] sm:$0xff]
    %v700 = vld [vmem:[#allocation2 + $0x1488] sm:$0xff]
    %v701 = vld [vmem:[#allocation2 + $0x1490] sm:$0xff]
    %v702 = vld [vmem:[#allocation2 + $0x1498] sm:$0xff]
    %v703 = vld [vmem:[#allocation2 + $0x14a0] sm:$0xff]
    %v704 = vld [vmem:[#allocation2 + $0x14a8] sm:$0xff]
    %v705 = vld [vmem:[#allocation2 + $0x14b0] sm:$0xff]
    %v706 = vld [vmem:[#allocation2 + $0x14b8] sm:$0xff]
    %v707 = vld [vmem:[#allocation2 + $0x14c0] sm:$0xff]
    %v708 = vld [vmem:[#allocation2 + $0x14c8] sm:$0xff]
    %v709 = vld [vmem:[#allocation2 + $0x14d0] sm:$0xff]
    %v710 = vld [vmem:[#allocation2 + $0x14d8] sm:$0xff]
    %v711 = vld [vmem:[#allocation2 + $0x14e0] sm:$0xff]
    %v712 = vld [vmem:[#allocation2 + $0x14e8] sm:$0xff]
    %v713 = vld [vmem:[#allocation2 + $0x14f0] sm:$0xff]
    %v714 = vld [vmem:[#allocation2 + $0x14f8] sm:$0xff]
    %v715 = vld [vmem:[#allocation2 + $0x1500] sm:$0xff]
    %v716 = vld [vmem:[#allocation2 + $0x1508] sm:$0xff]
    %v717 = vld [vmem:[#allocation2 + $0x1510] sm:$0xff]
    %v718 = vld [vmem:[#allocation2 + $0x1518] sm:$0xff]
    %v719 = vld [vmem:[#allocation2 + $0x1520] sm:$0xff]
    %v720 = vld [vmem:[#allocation2 + $0x1528] sm:$0xff]
    %v721 = vld [vmem:[#allocation2 + $0x1530] sm:$0xff]
    %v722 = vld [vmem:[#allocation2 + $0x1538] sm:$0xff]
    %v723 = vld [vmem:[#allocation2 + $0x1540] sm:$0xff]
    %v724 = vld [vmem:[#allocation2 + $0x1548] sm:$0xff]
    %v725 = vld [vmem:[#allocation2 + $0x1550] sm:$0xff]
    %v726 = vld [vmem:[#allocation2 + $0x1558] sm:$0xff]
    %v727 = vld [vmem:[#allocation2 + $0x1560] sm:$0xff]
    %v728 = vld [vmem:[#allocation2 + $0x1568] sm:$0xff]
    %v729 = vld [vmem:[#allocation2 + $0x1570] sm:$0xff]
    %v730 = vld [vmem:[#allocation2 + $0x1578] sm:$0xff]
    %v731 = vld [vmem:[#allocation2 + $0x1580] sm:$0xff]
    %v732 = vld [vmem:[#allocation2 + $0x1588] sm:$0xff]
    %v733 = vld [vmem:[#allocation2 + $0x1590] sm:$0xff]
    %v734 = vld [vmem:[#allocation2 + $0x1598] sm:$0xff]
    %v735 = vld [vmem:[#allocation2 + $0x15a0] sm:$0xff]
    %v736 = vld [vmem:[#allocation2 + $0x15a8] sm:$0xff]
    %v737 = vld [vmem:[#allocation2 + $0x15b0] sm:$0xff]
    %v738 = vld [vmem:[#allocation2 + $0x15b8] sm:$0xff]
    %v739 = vld [vmem:[#allocation2 + $0x15c0] sm:$0xff]
    %v740 = vld [vmem:[#allocation2 + $0x15c8] sm:$0xff]
    %v741 = vld [vmem:[#allocation2 + $0x15d0] sm:$0xff]
    %v742 = vld [vmem:[#allocation2 + $0x15d8] sm:$0xff]
    %v743 = vld [vmem:[#allocation2 + $0x15e0] sm:$0xff]
    %v744 = vld [vmem:[#allocation2 + $0x15e8] sm:$0xff]
    %v745 = vld [vmem:[#allocation2 + $0x15f0] sm:$0xff]
    %v746 = vld [vmem:[#allocation2 + $0x15f8] sm:$0xff]
    %v747 = vld [vmem:[#allocation2 + $0x1600] sm:$0xff]
    %v748 = vld [vmem:[#allocation2 + $0x1608] sm:$0xff]
    %v749 = vld [vmem:[#allocation2 + $0x1610] sm:$0xff]
    %v750 = vld [vmem:[#allocation2 + $0x1618] sm:$0xff]
    %v751 = vld [vmem:[#allocation2 + $0x1620] sm:$0xff]
    %v752 = vld [vmem:[#allocation2 + $0x1628] sm:$0xff]
    %v753 = vld [vmem:[#allocation2 + $0x1630] sm:$0xff]
    %v754 = vld [vmem:[#allocation2 + $0x1638] sm:$0xff]
    %v755 = vld [vmem:[#allocation2 + $0x1640] sm:$0xff]
    %v756 = vld [vmem:[#allocation2 + $0x1648] sm:$0xff]
    %v757 = vld [vmem:[#allocation2 + $0x1650] sm:$0xff]
    %v758 = vld [vmem:[#allocation2 + $0x1658] sm:$0xff]
    %v759 = vld [vmem:[#allocation2 + $0x1660] sm:$0xff]
    %v760 = vld [vmem:[#allocation2 + $0x1668] sm:$0xff]
    %v761 = vld [vmem:[#allocation2 + $0x1670] sm:$0xff]
    %v762 = vld [vmem:[#allocation2 + $0x1678] sm:$0xff]
    %v763 = vld [vmem:[#allocation2 + $0x1680] sm:$0xff]
    %v764 = vld [vmem:[#allocation2 + $0x1688] sm:$0xff]
    %v765 = vld [vmem:[#allocation2 + $0x1690] sm:$0xff]
    %v766 = vld [vmem:[#allocation2 + $0x1698] sm:$0xff]
    %v767 = vld [vmem:[#allocation2 + $0x16a0] sm:$0xff]
    %v768 = vld [vmem:[#allocation2 + $0x16a8] sm:$0xff]
    %v769 = vld [vmem:[#allocation2 + $0x16b0] sm:$0xff]
    %v770 = vld [vmem:[#allocation2 + $0x16b8] sm:$0xff]
    %v771 = vld [vmem:[#allocation2 + $0x16c0] sm:$0xff]
    %v772 = vld [vmem:[#allocation2 + $0x16c8] sm:$0xff]
    %v773 = vld [vmem:[#allocation2 + $0x16d0] sm:$0xff]
    %v774 = vld [vmem:[#allocation2 + $0x16d8] sm:$0xff]
    %v775 = vld [vmem:[#allocation2 + $0x16e0] sm:$0xff]
    %v776 = vld [vmem:[#allocation2 + $0x16e8] sm:$0xff]
    %v777 = vld [vmem:[#allocation2 + $0x16f0] sm:$0xff]
    %v778 = vld [vmem:[#allocation2 + $0x16f8] sm:$0xff]
    %v779 = vld [vmem:[#allocation2 + $0x1700] sm:$0xff]
    %v780 = vld [vmem:[#allocation2 + $0x1708] sm:$0xff]
    %v781 = vld [vmem:[#allocation2 + $0x1710] sm:$0xff]
    %v782 = vld [vmem:[#allocation2 + $0x1718] sm:$0xff]
    %v783 = vld [vmem:[#allocation2 + $0x1720] sm:$0xff]
    %v784 = vld [vmem:[#allocation2 + $0x1728] sm:$0xff]
    %v785 = vld [vmem:[#allocation2 + $0x1730] sm:$0xff]
    %v786 = vld [vmem:[#allocation2 + $0x1738] sm:$0xff]
    %v787 = vld [vmem:[#allocation2 + $0x1740] sm:$0xff]
    %v788 = vld [vmem:[#allocation2 + $0x1748] sm:$0xff]
    %v789 = vld [vmem:[#allocation2 + $0x1750] sm:$0xff]
    %v790 = vld [vmem:[#allocation2 + $0x1758] sm:$0xff]
    %v791 = vld [vmem:[#allocation2 + $0x1760] sm:$0xff]
    %v792 = vld [vmem:[#allocation2 + $0x1768] sm:$0xff]
    %v793 = vld [vmem:[#allocation2 + $0x1770] sm:$0xff]
    %v794 = vld [vmem:[#allocation2 + $0x1778] sm:$0xff]
    %v795 = vld [vmem:[#allocation2 + $0x1780] sm:$0xff]
    %v796 = vld [vmem:[#allocation2 + $0x1788] sm:$0xff]
    %v797 = vld [vmem:[#allocation2 + $0x1790] sm:$0xff]
    %v798 = vld [vmem:[#allocation2 + $0x1798] sm:$0xff]
    %v799 = vld [vmem:[#allocation2 + $0x17a0] sm:$0xff]
    %v800 = vld [vmem:[#allocation2 + $0x17a8] sm:$0xff]
    %v801 = vld [vmem:[#allocation2 + $0x17b0] sm:$0xff]
    %v802 = vld [vmem:[#allocation2 + $0x17b8] sm:$0xff]
    %v803 = vld [vmem:[#allocation2 + $0x17c0] sm:$0xff]
    %v804 = vld [vmem:[#allocation2 + $0x17c8] sm:$0xff]
    %v805 = vld [vmem:[#allocation2 + $0x17d0] sm:$0xff]
    %v806 = vld [vmem:[#allocation2 + $0x17d8] sm:$0xff]
    %v807 = vld [vmem:[#allocation2 + $0x17e0] sm:$0xff]
    %v808 = vld [vmem:[#allocation2 + $0x17e8] sm:$0xff]
    %v809 = vld [vmem:[#allocation2 + $0x17f0] sm:$0xff]
    %v810 = vld [vmem:[#allocation2 + $0x17f8] sm:$0xff]
    %v811 = vld [vmem:[#allocation2 + $0x1800] sm:$0xff]
    %v812 = vld [vmem:[#allocation2 + $0x1808] sm:$0xff]
    %v813 = vld [vmem:[#allocation2 + $0x1810] sm:$0xff]
    %v814 = vld [vmem:[#allocation2 + $0x1818] sm:$0xff]
    %v815 = vld [vmem:[#allocation2 + $0x1820] sm:$0xff]
    %v816 = vld [vmem:[#allocation2 + $0x1828] sm:$0xff]
    %v817 = vld [vmem:[#allocation2 + $0x1830] sm:$0xff]
    %v818 = vld [vmem:[#allocation2 + $0x1838] sm:$0xff]
    %v819 = vld [vmem:[#allocation2 + $0x1840] sm:$0xff]
    %v820 = vld [vmem:[#allocation2 + $0x1848] sm:$0xff]
    %v821 = vld [vmem:[#allocation2 + $0x1850] sm:$0xff]
    %v822 = vld [vmem:[#allocation2 + $0x1858] sm:$0xff]
    %v823 = vld [vmem:[#allocation2 + $0x1860] sm:$0xff]
    %v824 = vld [vmem:[#allocation2 + $0x1868] sm:$0xff]
    %v825 = vld [vmem:[#allocation2 + $0x1870] sm:$0xff]
    %v826 = vld [vmem:[#allocation2 + $0x1878] sm:$0xff]
    %v827 = vld [vmem:[#allocation2 + $0x1880] sm:$0xff]
    %v828 = vld [vmem:[#allocation2 + $0x1888] sm:$0xff]
    %v829 = vld [vmem:[#allocation2 + $0x1890] sm:$0xff]
    %v830 = vld [vmem:[#allocation2 + $0x1898] sm:$0xff]
    %v831 = vld [vmem:[#allocation2 + $0x18a0] sm:$0xff]
    %v832 = vld [vmem:[#allocation2 + $0x18a8] sm:$0xff]
    %v833 = vld [vmem:[#allocation2 + $0x18b0] sm:$0xff]
    %v834 = vld [vmem:[#allocation2 + $0x18b8] sm:$0xff]
    %v835 = vld [vmem:[#allocation2 + $0x18c0] sm:$0xff]
    %v836 = vld [vmem:[#allocation2 + $0x18c8] sm:$0xff]
    %v837 = vld [vmem:[#allocation2 + $0x18d0] sm:$0xff]
    %v838 = vld [vmem:[#allocation2 + $0x18d8] sm:$0xff]
    %v839 = vld [vmem:[#allocation2 + $0x18e0] sm:$0xff]
    %v840 = vld [vmem:[#allocation2 + $0x18e8] sm:$0xff]
    %v841 = vld [vmem:[#allocation2 + $0x18f0] sm:$0xff]
    %v842 = vld [vmem:[#allocation2 + $0x18f8] sm:$0xff]
    %v843 = vld [vmem:[#allocation2 + $0x1900] sm:$0xff]
    %v844 = vld [vmem:[#allocation2 + $0x1908] sm:$0xff]
    %v845 = vld [vmem:[#allocation2 + $0x1910] sm:$0xff]
    %v846 = vld [vmem:[#allocation2 + $0x1918] sm:$0xff]
    %v847 = vld [vmem:[#allocation2 + $0x1920] sm:$0xff]
    %v848 = vld [vmem:[#allocation2 + $0x1928] sm:$0xff]
    %v849 = vld [vmem:[#allocation2 + $0x1930] sm:$0xff]
    %v850 = vld [vmem:[#allocation2 + $0x1938] sm:$0xff]
    %v851 = vld [vmem:[#allocation2 + $0x1940] sm:$0xff]
    %v852 = vld [vmem:[#allocation2 + $0x1948] sm:$0xff]
    %v853 = vld [vmem:[#allocation2 + $0x1950] sm:$0xff]
    %v854 = vld [vmem:[#allocation2 + $0x1958] sm:$0xff]
    %v855 = vld [vmem:[#allocation2 + $0x1960] sm:$0xff]
    %v856 = vld [vmem:[#allocation2 + $0x1968] sm:$0xff]
    %v857 = vld [vmem:[#allocation2 + $0x1970] sm:$0xff]
    %v858 = vld [vmem:[#allocation2 + $0x1978] sm:$0xff]
    %v859 = vld [vmem:[#allocation2 + $0x1980] sm:$0xff]
    %v860 = vld [vmem:[#allocation2 + $0x1988] sm:$0xff]
    %v861 = vld [vmem:[#allocation2 + $0x1990] sm:$0xff]
    %v862 = vld [vmem:[#allocation2 + $0x1998] sm:$0xff]
    %v863 = vld [vmem:[#allocation2 + $0x19a0] sm:$0xff]
    %v864 = vld [vmem:[#allocation2 + $0x19a8] sm:$0xff]
    %v865 = vld [vmem:[#allocation2 + $0x19b0] sm:$0xff]
    %v866 = vld [vmem:[#allocation2 + $0x19b8] sm:$0xff]
    %v867 = vld [vmem:[#allocation2 + $0x19c0] sm:$0xff]
    %v868 = vld [vmem:[#allocation2 + $0x19c8] sm:$0xff]
    %v869 = vld [vmem:[#allocation2 + $0x19d0] sm:$0xff]
    %v870 = vld [vmem:[#allocation2 + $0x19d8] sm:$0xff]
    %v871 = vld [vmem:[#allocation2 + $0x19e0] sm:$0xff]
    %v872 = vld [vmem:[#allocation2 + $0x19e8] sm:$0xff]
    %v873 = vld [vmem:[#allocation2 + $0x19f0] sm:$0xff]
    %v874 = vld [vmem:[#allocation2 + $0x19f8] sm:$0xff]
    %v875 = vld [vmem:[#allocation2 + $0x1a00] sm:$0xff]
    %v876 = vld [vmem:[#allocation2 + $0x1a08] sm:$0xff]
    %v877 = vld [vmem:[#allocation2 + $0x1a10] sm:$0xff]
    %v878 = vld [vmem:[#allocation2 + $0x1a18] sm:$0xff]
    %v879 = vld [vmem:[#allocation2 + $0x1a20] sm:$0xff]
    %v880 = vld [vmem:[#allocation2 + $0x1a28] sm:$0xff]
    %v881 = vld [vmem:[#allocation2 + $0x1a30] sm:$0xff]
    %v882 = vld [vmem:[#allocation2 + $0x1a38] sm:$0xff]
    %v883 = vld [vmem:[#allocation2 + $0x1a40] sm:$0xff]
    %v884 = vld [vmem:[#allocation2 + $0x1a48] sm:$0xff]
    %v885 = vld [vmem:[#allocation2 + $0x1a50] sm:$0xff]
    %v886 = vld [vmem:[#allocation2 + $0x1a58] sm:$0xff]
    %v887 = vld [vmem:[#allocation2 + $0x1a60] sm:$0xff]
    %v888 = vld [vmem:[#allocation2 + $0x1a68] sm:$0xff]
    %v889 = vld [vmem:[#allocation2 + $0x1a70] sm:$0xff]
    %v890 = vld [vmem:[#allocation2 + $0x1a78] sm:$0xff]
    %v891 = vld [vmem:[#allocation2 + $0x1a80] sm:$0xff]
    %v892 = vld [vmem:[#allocation2 + $0x1a88] sm:$0xff]
    %v893 = vld [vmem:[#allocation2 + $0x1a90] sm:$0xff]
    %v894 = vld [vmem:[#allocation2 + $0x1a98] sm:$0xff]
    %v895 = vld [vmem:[#allocation2 + $0x1aa0] sm:$0xff]
    %v896 = vld [vmem:[#allocation2 + $0x1aa8] sm:$0xff]
    %v897 = vld [vmem:[#allocation2 + $0x1ab0] sm:$0xff]
    %v898 = vld [vmem:[#allocation2 + $0x1ab8] sm:$0xff]
    %v899 = vld [vmem:[#allocation2 + $0x1ac0] sm:$0xff]
    %v900 = vld [vmem:[#allocation2 + $0x1ac8] sm:$0xff]
    %v901 = vld [vmem:[#allocation2 + $0x1ad0] sm:$0xff]
    %v902 = vld [vmem:[#allocation2 + $0x1ad8] sm:$0xff]
    %v903 = vld [vmem:[#allocation2 + $0x1ae0] sm:$0xff]
    %v904 = vld [vmem:[#allocation2 + $0x1ae8] sm:$0xff]
    %v905 = vld [vmem:[#allocation2 + $0x1af0] sm:$0xff]
    %v906 = vld [vmem:[#allocation2 + $0x1af8] sm:$0xff]
    %v909 = vcombine.high %v41, %v41
    %v911 = vunpack.c.l.s4 1983009808
    %v912 = vunpack.c.0.s8 %v911
    %v913 = vlaneseq
    %v914 = vshrl.u32 %v913, 7
    %v915 = vsub.s32 %v912, %v914
    %v916 = vrot.slane %v41, %v915
    %v918 = vunpack.c.l.s4 1983009808
    %v919 = vunpack.c.0.s8 %v918
    %v920 = vlaneseq
    %v921 = vshrl.u32 %v920, 7
    %v922 = vsub.s32 %v919, %v921
    %v923 = vrot.slane %v909, %v922
    %v924 = vcombine.high %v916, %v916
    %v925 = vcombine.high %v923, %v923
    %v926 = vcombine.high %v42, %v42
    %v928 = vunpack.c.l.s4 1983009808
    %v929 = vunpack.c.0.s8 %v928
    %v930 = vlaneseq
    %v931 = vshrl.u32 %v930, 7
    %v932 = vsub.s32 %v929, %v931
    %v933 = vrot.slane %v42, %v932
    %v935 = vunpack.c.l.s4 1983009808
    %v936 = vunpack.c.0.s8 %v935
    %v937 = vlaneseq
    %v938 = vshrl.u32 %v937, 7
    %v939 = vsub.s32 %v936, %v938
    %v940 = vrot.slane %v926, %v939
    %v941 = vcombine.high %v933, %v933
    %vm948 = vcmask 785408
    %v949 = vsel %vm948, %v940, 0
    %951 = vmatprep.subr.mxu0 %v44
    %952 = vmatpush1.msra.mxu0 %v43
    %953 = vmatprep.subr.mxu0 %v52
    %954 = vmatpush1.msra.mxu0 %v51
    %955 = vmatprep.subr.mxu0 %v60
    %956 = vmatpush1.msra.mxu0 %v59
    %957 = vmatprep.subr.mxu0 %v68
    %958 = vmatpush1.msra.mxu0 %v67
    %959 = vmatprep.subr.mxu0 %v76
    %960 = vmatpush1.msra.mxu0 %v75
    %961 = vmatprep.subr.mxu0 %v84
    %962 = vmatpush1.msra.mxu0 %v83
    %963 = vmatprep.subr.mxu0 %v92
    %964 = vmatpush1.msra.mxu0 %v91
    %965 = vmatprep.subr.mxu0 %v100
    %966 = vmatpush1.msra.mxu0 %v99
    %967 = vmatprep.subr.mxu0 %v108
    %968 = vmatpush1.msra.mxu0 %v107
    %969 = vmatprep.subr.mxu0 %v116
    %970 = vmatpush1.msra.mxu0 %v115
    %971 = vmatprep.subr.mxu0 %v124
    %972 = vmatpush1.msra.mxu0 %v123
    %973 = vmatprep.subr.mxu0 %v132
    %974 = vmatpush1.msra.mxu0 %v131
    %975 = vmatprep.subr.mxu0 %v140
    %976 = vmatpush1.msra.mxu0 %v139
    %977 = vmatprep.subr.mxu0 %v148
    %978 = vmatpush1.msra.mxu0 %v147
    %979 = vmatprep.subr.mxu0 %v156
    %980 = vmatpush1.msra.mxu0 %v155
    %981 = vmatprep.subr.mxu0 %v164
    %982 = vmatpush1.msra.mxu0 %v163
    %983 = vmatprep.subr.mxu0 %v172
    %984 = vmatpush1.msra.mxu0 %v171
    %985 = vmatprep.subr.mxu0 %v180
    %986 = vmatpush1.msra.mxu0 %v179
    %987 = vmatprep.subr.mxu0 %v188
    %988 = vmatpush1.msra.mxu0 %v187
    %989 = vmatprep.subr.mxu0 %v196
    %990 = vmatpush1.msra.mxu0 %v195
    %991 = vmatprep.subr.mxu0 %v204
    %992 = vmatpush1.msra.mxu0 %v203
    %993 = vmatprep.subr.mxu0 %v212
    %994 = vmatpush1.msra.mxu0 %v211
    %995 = vmatprep.subr.mxu0 %v220
    %996 = vmatpush1.msra.mxu0 %v219
    %997 = vmatprep.subr.mxu0 %v228
    %998 = vmatpush1.msra.mxu0 %v227
    %999 = vmatprep.subr.mxu0 %v236
    %1000 = vmatpush1.msra.mxu0 %v235
    %1001 = vmatprep.subr.mxu0 %v244
    %1002 = vmatpush1.msra.mxu0 %v243
    %1003 = vmatprep.subr.mxu0 %v252
    %1004 = vmatpush1.msra.mxu0 %v251
    %1005 = vmatprep.subr.mxu0 %v260
    %1006 = vmatpush1.msra.mxu0 %v259
    %1007 = vmatprep.subr.mxu0 %v268
    %1008 = vmatpush1.msra.mxu0 %v267
    %1009 = vmatprep.subr.mxu0 %v276
    %1010 = vmatpush1.msra.mxu0 %v275
    %1011 = vmatprep.subr.mxu0 %v284
    %1012 = vmatpush1.msra.mxu0 %v283
    %1013 = vmatprep.subr.mxu0 %v292
    %1014 = vmatpush1.msra.mxu0 %v291
    %1015 = vmatprep.mubr.f32.mxu0 %v924
    %1016 = vmatmul.mubr.f32.gmra.mrb[0].mxu0 %v916
    %v1017 = vpop.f32.mrb[0].mxu0
    %v1018 = vadd.f32 0.0, %v1017
    %v1019 = vpop.f32.mrb[0].mxu0
    %v1020 = vadd.f32 0.0, %v1019
    %1021 = vdwg.mxu0
    %1022 = vmatprep.subr.mxu0 %v300
    %1023 = vmatpush1.msra.mxu0 %v299
    %1024 = vmatprep.subr.mxu0 %v308
    %1025 = vmatpush1.msra.mxu0 %v307
    %1026 = vmatprep.subr.mxu0 %v316
    %1027 = vmatpush1.msra.mxu0 %v315
    %1028 = vmatprep.subr.mxu0 %v324
    %1029 = vmatpush1.msra.mxu0 %v323
    %1030 = vmatprep.subr.mxu0 %v332
    %1031 = vmatpush1.msra.mxu0 %v331
    %1032 = vmatprep.subr.mxu0 %v340
    %1033 = vmatpush1.msra.mxu0 %v339
    %1034 = vmatprep.subr.mxu0 %v348
    %1035 = vmatpush1.msra.mxu0 %v347
    %1036 = vmatprep.subr.mxu0 %v356
    %1037 = vmatpush1.msra.mxu0 %v355
    %1038 = vmatprep.subr.mxu0 %v364
    %1039 = vmatpush1.msra.mxu0 %v363
    %1040 = vmatprep.subr.mxu0 %v372
    %1041 = vmatpush1.msra.mxu0 %v371
    %1042 = vmatprep.subr.mxu0 %v380
    %1043 = vmatpush1.msra.mxu0 %v379
    %1044 = vmatprep.subr.mxu0 %v388
    %1045 = vmatpush1.msra.mxu0 %v387
    %1046 = vmatprep.subr.mxu0 %v396
    %1047 = vmatpush1.msra.mxu0 %v395
    %1048 = vmatprep.subr.mxu0 %v404
    %1049 = vmatpush1.msra.mxu0 %v403
    %1050 = vmatprep.subr.mxu0 %v412
    %1051 = vmatpush1.msra.mxu0 %v411
    %1052 = vmatprep.subr.mxu0 %v420
    %1053 = vmatpush1.msra.mxu0 %v419
    %1054 = vmatprep.subr.mxu0 %v428
    %1055 = vmatpush1.msra.mxu0 %v427
    %1056 = vmatprep.subr.mxu0 %v436
    %1057 = vmatpush1.msra.mxu0 %v435
    %1058 = vmatprep.subr.mxu0 %v444
    %1059 = vmatpush1.msra.mxu0 %v443
    %1060 = vmatprep.subr.mxu0 %v452
    %1061 = vmatpush1.msra.mxu0 %v451
    %1062 = vmatprep.subr.mxu0 %v460
    %1063 = vmatpush1.msra.mxu0 %v459
    %1064 = vmatprep.subr.mxu0 %v468
    %1065 = vmatpush1.msra.mxu0 %v467
    %1066 = vmatprep.subr.mxu0 %v476
    %1067 = vmatpush1.msra.mxu0 %v475
    %1068 = vmatprep.subr.mxu0 %v484
    %1069 = vmatpush1.msra.mxu0 %v483
    %1070 = vmatprep.subr.mxu0 %v492
    %1071 = vmatpush1.msra.mxu0 %v491
    %1072 = vmatprep.subr.mxu0 %v500
    %1073 = vmatpush1.msra.mxu0 %v499
    %1074 = vmatprep.subr.mxu0 %v508
    %1075 = vmatpush1.msra.mxu0 %v507
    %1076 = vmatprep.subr.mxu0 %v516
    %1077 = vmatpush1.msra.mxu0 %v515
    %1078 = vmatprep.subr.mxu0 %v524
    %1079 = vmatpush1.msra.mxu0 %v523
    %1080 = vmatprep.subr.mxu0 %v532
    %1081 = vmatpush1.msra.mxu0 %v531
    %1082 = vmatprep.subr.mxu0 %v540
    %1083 = vmatpush1.msra.mxu0 %v539
    %1084 = vmatprep.subr.mxu0 %v548
    %1085 = vmatpush1.msra.mxu0 %v547
    %1086 = vmatprep.mubr.f32.mxu0 %v925
    %1087 = vmatmul.mubr.f32.gmra.mrb[0].mxu0 %v923
    %v1088 = vpop.f32.mrb[0].mxu0
    %v1089 = vadd.f32 %v1018, %v1088
    %v1090 = vpop.f32.mrb[0].mxu0
    %v1091 = vadd.f32 %v1020, %v1090
    %1092 = vdwg.mxu0
    %1093 = vmatprep.subr.mxu0 %v556
    %1094 = vmatpush1.msra.mxu0 %v555
    %1095 = vmatprep.subr.mxu0 %v564
    %1096 = vmatpush1.msra.mxu0 %v563
    %1097 = vmatprep.subr.mxu0 %v572
    %1098 = vmatpush1.msra.mxu0 %v571
    %1099 = vmatprep.subr.mxu0 %v580
    %1100 = vmatpush1.msra.mxu0 %v579
    %1101 = vmatprep.subr.mxu0 %v588
    %1102 = vmatpush1.msra.mxu0 %v587
    %1103 = vmatprep.subr.mxu0 %v596
    %1104 = vmatpush1.msra.mxu0 %v595
    %1105 = vmatprep.subr.mxu0 %v604
    %1106 = vmatpush1.msra.mxu0 %v603
    %1107 = vmatprep.subr.mxu0 %v612
    %1108 = vmatpush1.msra.mxu0 %v611
    %1109 = vmatprep.subr.mxu0 %v620
    %1110 = vmatpush1.msra.mxu0 %v619
    %1111 = vmatprep.subr.mxu0 %v628
    %1112 = vmatpush1.msra.mxu0 %v627
    %1113 = vmatprep.subr.mxu0 %v636
    %1114 = vmatpush1.msra.mxu0 %v635
    %1115 = vmatprep.subr.mxu0 %v644
    %1116 = vmatpush1.msra.mxu0 %v643
    %1117 = vmatprep.subr.mxu0 %v652
    %1118 = vmatpush1.msra.mxu0 %v651
    %1119 = vmatprep.subr.mxu0 %v660
    %1120 = vmatpush1.msra.mxu0 %v659
    %1121 = vmatprep.subr.mxu0 %v668
    %1122 = vmatpush1.msra.mxu0 %v667
    %1123 = vmatprep.subr.mxu0 %v676
    %1124 = vmatpush1.msra.mxu0 %v675
    %1125 = vmatprep.subr.mxu0 %v684
    %1126 = vmatpush1.msra.mxu0 %v683
    %1127 = vmatprep.subr.mxu0 %v692
    %1128 = vmatpush1.msra.mxu0 %v691
    %1129 = vmatprep.subr.mxu0 %v700
    %1130 = vmatpush1.msra.mxu0 %v699
    %1131 = vmatprep.subr.mxu0 %v708
    %1132 = vmatpush1.msra.mxu0 %v707
    %1133 = vmatprep.subr.mxu0 %v716
    %1134 = vmatpush1.msra.mxu0 %v715
    %1135 = vmatprep.subr.mxu0 %v724
    %1136 = vmatpush1.msra.mxu0 %v723
    %1137 = vmatprep.subr.mxu0 %v732
    %1138 = vmatpush1.msra.mxu0 %v731
    %1139 = vmatprep.subr.mxu0 %v740
    %1140 = vmatpush1.msra.mxu0 %v739
    %1141 = vmatprep.subr.mxu0 %v748
    %1142 = vmatpush1.msra.mxu0 %v747
    %1143 = vmatprep.subr.mxu0 %v756
    %1144 = vmatpush1.msra.mxu0 %v755
    %1145 = vmatprep.subr.mxu0 %v764
    %1146 = vmatpush1.msra.mxu0 %v763
    %1147 = vmatprep.subr.mxu0 %v772
    %1148 = vmatpush1.msra.mxu0 %v771
    %1149 = vmatprep.subr.mxu0 %v780
    %1150 = vmatpush1.msra.mxu0 %v779
    %1151 = vmatprep.subr.mxu0 %v788
    %1152 = vmatpush1.msra.mxu0 %v787
    %1153 = vmatprep.subr.mxu0 %v796
    %1154 = vmatpush1.msra.mxu0 %v795
    %1155 = vmatprep.subr.mxu0 %v804
    %1156 = vmatpush1.msra.mxu0 %v803
    %1157 = vmatprep.mubr.f32.mxu0 %v941
    %1158 = vmatmul.mubr.f32.gmra.mrb[0].mxu0 %v933
    %v1159 = vpop.f32.mrb[0].mxu0
    %v1160 = vadd.f32 %v1089, %v1159
    %v1161 = vpop.f32.mrb[0].mxu0
    %v1162 = vadd.f32 %v1091, %v1161
    %1163 = vdwg.mxu0
    %1164 = vmatprep.subr.mxu0 %v812
    %1165 = vmatpush1.msra.mxu0 %v811
    %1166 = vmatprep.subr.mxu0 %v820
    %1167 = vmatpush1.msra.mxu0 %v819
    %1168 = vmatprep.subr.mxu0 %v828
    %1169 = vmatpush1.msra.mxu0 %v827
    %1170 = vmatprep.subr.mxu0 %v836
    %1171 = vmatpush1.msra.mxu0 %v835
    %1172 = vmatprep.subr.mxu0 %v844
    %1173 = vmatpush1.msra.mxu0 %v843
    %1174 = vmatprep.subr.mxu0 %v852
    %1175 = vmatpush1.msra.mxu0 %v851
    %1176 = vmatprep.subr.mxu0 %v860
    %1177 = vmatpush1.msra.mxu0 %v859
    %1178 = vmatprep.subr.mxu0 %v868
    %1179 = vmatpush1.msra.mxu0 %v867
    %1180 = vmatprep.subr.mxu0 %v876
    %1181 = vmatpush1.msra.mxu0 %v875
    %1182 = vmatprep.subr.mxu0 %v884
    %1183 = vmatpush1.msra.mxu0 %v883
    %1184 = vmatprep.subr.mxu0 %v892
    %1185 = vmatpush1.msra.mxu0 %v891
    %1186 = vmatprep.subr.mxu0 %v900
    %1187 = vmatpush1.msra.mxu0 %v899
    %1188 = vmatprep.subr.mxu0 0.0
    %1189 = vmatpush1.msra.mxu0 0.0
    %1190 = vmatprep.subr.mxu0 0.0
    %1191 = vmatpush1.msra.mxu0 0.0
    %1192 = vmatprep.subr.mxu0 0.0
    %1193 = vmatpush1.msra.mxu0 0.0
    %1194 = vmatprep.subr.mxu0 0.0
    %1195 = vmatpush1.msra.mxu0 0.0
    %1196 = vmatprep.subr.mxu0 0.0
    %1197 = vmatpush1.msra.mxu0 0.0
    %1198 = vmatprep.subr.mxu0 0.0
    %1199 = vmatpush1.msra.mxu0 0.0
    %1200 = vmatprep.subr.mxu0 0.0
    %1201 = vmatpush1.msra.mxu0 0.0
    %1202 = vmatprep.subr.mxu0 0.0
    %1203 = vmatpush1.msra.mxu0 0.0
    %1204 = vmatprep.subr.mxu0 0.0
    %1205 = vmatpush1.msra.mxu0 0.0
    %1206 = vmatprep.subr.mxu0 0.0
    %1207 = vmatpush1.msra.mxu0 0.0
    %1208 = vmatprep.subr.mxu0 0.0
    %1209 = vmatpush1.msra.mxu0 0.0
    %1210 = vmatprep.subr.mxu0 0.0
    %1211 = vmatpush1.msra.mxu0 0.0
    %1212 = vmatprep.subr.mxu0 0.0
    %1213 = vmatpush1.msra.mxu0 0.0
    %1214 = vmatprep.subr.mxu0 0.0
    %1215 = vmatpush1.msra.mxu0 0.0
    %1216 = vmatprep.subr.mxu0 0.0
    %1217 = vmatpush1.msra.mxu0 0.0
    %1218 = vmatprep.subr.mxu0 0.0
    %1219 = vmatpush1.msra.mxu0 0.0
    %1220 = vmatprep.subr.mxu0 0.0
    %1221 = vmatpush1.msra.mxu0 0.0
    %1222 = vmatprep.subr.mxu0 0.0
    %1223 = vmatpush1.msra.mxu0 0.0
    %1224 = vmatprep.subr.mxu0 0.0
    %1225 = vmatpush1.msra.mxu0 0.0
    %1226 = vmatprep.subr.mxu0 0.0
    %1227 = vmatpush1.msra.mxu0 0.0
    %1228 = vmatprep.mubr.f32.mxu0 0.0
    %1229 = vmatmul.mubr.f32.gmra.mrb[0].mxu0 %v949
    %v1230 = vpop.f32.mrb[0].mxu0
    %v1231 = vadd.f32 %v1160, %v1230
    %v1232 = vpop.f32.mrb[0].mxu0
    %v1233 = vadd.f32 %v1162, %v1232
    %1234 = vdwg.mxu0
    %1235 = vmatprep.subr.mxu0 %v46
    %1236 = vmatpush1.msra.mxu0 %v45
    %1237 = vmatprep.subr.mxu0 %v54
    %1238 = vmatpush1.msra.mxu0 %v53
    %1239 = vmatprep.subr.mxu0 %v62
    %1240 = vmatpush1.msra.mxu0 %v61
    %1241 = vmatprep.subr.mxu0 %v70
    %1242 = vmatpush1.msra.mxu0 %v69
    %1243 = vmatprep.subr.mxu0 %v78
    %1244 = vmatpush1.msra.mxu0 %v77
    %1245 = vmatprep.subr.mxu0 %v86
    %1246 = vmatpush1.msra.mxu0 %v85
    %1247 = vmatprep.subr.mxu0 %v94
    %1248 = vmatpush1.msra.mxu0 %v93
    %1249 = vmatprep.subr.mxu0 %v102
    %1250 = vmatpush1.msra.mxu0 %v101
    %1251 = vmatprep.subr.mxu0 %v110
    %1252 = vmatpush1.msra.mxu0 %v109
    %1253 = vmatprep.subr.mxu0 %v118
    %1254 = vmatpush1.msra.mxu0 %v117
    %1255 = vmatprep.subr.mxu0 %v126
    %1256 = vmatpush1.msra.mxu0 %v125
    %1257 = vmatprep.subr.mxu0 %v134
    %1258 = vmatpush1.msra.mxu0 %v133
    %1259 = vmatprep.subr.mxu0 %v142
    %1260 = vmatpush1.msra.mxu0 %v141
    %1261 = vmatprep.subr.mxu0 %v150
    %1262 = vmatpush1.msra.mxu0 %v149
    %1263 = vmatprep.subr.mxu0 %v158
    %1264 = vmatpush1.msra.mxu0 %v157
    %1265 = vmatprep.subr.mxu0 %v166
    %1266 = vmatpush1.msra.mxu0 %v165
    %1267 = vmatprep.subr.mxu0 %v174
    %1268 = vmatpush1.msra.mxu0 %v173
    %1269 = vmatprep.subr.mxu0 %v182
    %1270 = vmatpush1.msra.mxu0 %v181
    %1271 = vmatprep.subr.mxu0 %v190
    %1272 = vmatpush1.msra.mxu0 %v189
    %1273 = vmatprep.subr.mxu0 %v198
    %1274 = vmatpush1.msra.mxu0 %v197
    %1275 = vmatprep.subr.mxu0 %v206
    %1276 = vmatpush1.msra.mxu0 %v205
    %1277 = vmatprep.subr.mxu0 %v214
    %1278 = vmatpush1.msra.mxu0 %v213
    %1279 = vmatprep.subr.mxu0 %v222
    %1280 = vmatpush1.msra.mxu0 %v221
    %1281 = vmatprep.subr.mxu0 %v230
    %1282 = vmatpush1.msra.mxu0 %v229
    %1283 = vmatprep.subr.mxu0 %v238
    %1284 = vmatpush1.msra.mxu0 %v237
    %1285 = vmatprep.subr.mxu0 %v246
    %1286 = vmatpush1.msra.mxu0 %v245
    %1287 = vmatprep.subr.mxu0 %v254
    %1288 = vmatpush1.msra.mxu0 %v253
    %1289 = vmatprep.subr.mxu0 %v262
    %1290 = vmatpush1.msra.mxu0 %v261
    %1291 = vmatprep.subr.mxu0 %v270
    %1292 = vmatpush1.msra.mxu0 %v269
    %1293 = vmatprep.subr.mxu0 %v278
    %1294 = vmatpush1.msra.mxu0 %v277
    %1295 = vmatprep.subr.mxu0 %v286
    %1296 = vmatpush1.msra.mxu0 %v285
    %1297 = vmatprep.subr.mxu0 %v294
    %1298 = vmatpush1.msra.mxu0 %v293
    %1299 = vmatprep.mubr.f32.mxu0 %v924
    %1300 = vmatmul.mubr.f32.gmra.mrb[0].mxu0 %v916
    %v1301 = vpop.f32.mrb[0].mxu0
    %v1302 = vadd.f32 0.0, %v1301
    %v1303 = vpop.f32.mrb[0].mxu0
    %v1304 = vadd.f32 0.0, %v1303
    %1305 = vdwg.mxu0
    %1306 = vmatprep.subr.mxu0 %v302
    %1307 = vmatpush1.msra.mxu0 %v301
    %1308 = vmatprep.subr.mxu0 %v310
    %1309 = vmatpush1.msra.mxu0 %v309
    %1310 = vmatprep.subr.mxu0 %v318
    %1311 = vmatpush1.msra.mxu0 %v317
    %1312 = vmatprep.subr.mxu0 %v326
    %1313 = vmatpush1.msra.mxu0 %v325
    %1314 = vmatprep.subr.mxu0 %v334
    %1315 = vmatpush1.msra.mxu0 %v333
    %1316 = vmatprep.subr.mxu0 %v342
    %1317 = vmatpush1.msra.mxu0 %v341
    %1318 = vmatprep.subr.mxu0 %v350
    %1319 = vmatpush1.msra.mxu0 %v349
    %1320 = vmatprep.subr.mxu0 %v358
    %1321 = vmatpush1.msra.mxu0 %v357
    %1322 = vmatprep.subr.mxu0 %v366
    %1323 = vmatpush1.msra.mxu0 %v365
    %1324 = vmatprep.subr.mxu0 %v374
    %1325 = vmatpush1.msra.mxu0 %v373
    %1326 = vmatprep.subr.mxu0 %v382
    %1327 = vmatpush1.msra.mxu0 %v381
    %1328 = vmatprep.subr.mxu0 %v390
    %1329 = vmatpush1.msra.mxu0 %v389
    %1330 = vmatprep.subr.mxu0 %v398
    %1331 = vmatpush1.msra.mxu0 %v397
    %1332 = vmatprep.subr.mxu0 %v406
    %1333 = vmatpush1.msra.mxu0 %v405
    %1334 = vmatprep.subr.mxu0 %v414
    %1335 = vmatpush1.msra.mxu0 %v413
    %1336 = vmatprep.subr.mxu0 %v422
    %1337 = vmatpush1.msra.mxu0 %v421
    %1338 = vmatprep.subr.mxu0 %v430
    %1339 = vmatpush1.msra.mxu0 %v429
    %1340 = vmatprep.subr.mxu0 %v438
    %1341 = vmatpush1.msra.mxu0 %v437
    %1342 = vmatprep.subr.mxu0 %v446
    %1343 = vmatpush1.msra.mxu0 %v445
    %1344 = vmatprep.subr.mxu0 %v454
    %1345 = vmatpush1.msra.mxu0 %v453
    %1346 = vmatprep.subr.mxu0 %v462
    %1347 = vmatpush1.msra.mxu0 %v461
    %1348 = vmatprep.subr.mxu0 %v470
    %1349 = vmatpush1.msra.mxu0 %v469
    %1350 = vmatprep.subr.mxu0 %v478
    %1351 = vmatpush1.msra.mxu0 %v477
    %1352 = vmatprep.subr.mxu0 %v486
    %1353 = vmatpush1.msra.mxu0 %v485
    %1354 = vmatprep.subr.mxu0 %v494
    %1355 = vmatpush1.msra.mxu0 %v493
    %1356 = vmatprep.subr.mxu0 %v502
    %1357 = vmatpush1.msra.mxu0 %v501
    %1358 = vmatprep.subr.mxu0 %v510
    %1359 = vmatpush1.msra.mxu0 %v509
    %1360 = vmatprep.subr.mxu0 %v518
    %1361 = vmatpush1.msra.mxu0 %v517
    %1362 = vmatprep.subr.mxu0 %v526
    %1363 = vmatpush1.msra.mxu0 %v525
    %1364 = vmatprep.subr.mxu0 %v534
    %1365 = vmatpush1.msra.mxu0 %v533
    %1366 = vmatprep.subr.mxu0 %v542
    %1367 = vmatpush1.msra.mxu0 %v541
    %1368 = vmatprep.subr.mxu0 %v550
    %1369 = vmatpush1.msra.mxu0 %v549
    %1370 = vmatprep.mubr.f32.mxu0 %v925
    %1371 = vmatmul.mubr.f32.gmra.mrb[0].mxu0 %v923
    %v1372 = vpop.f32.mrb[0].mxu0
    %v1373 = vadd.f32 %v1302, %v1372
    %v1374 = vpop.f32.mrb[0].mxu0
    %v1375 = vadd.f32 %v1304, %v1374
    %1376 = vdwg.mxu0
    %1377 = vmatprep.subr.mxu0 %v558
    %1378 = vmatpush1.msra.mxu0 %v557
    %1379 = vmatprep.subr.mxu0 %v566
    %1380 = vmatpush1.msra.mxu0 %v565
    %1381 = vmatprep.subr.mxu0 %v574
    %1382 = vmatpush1.msra.mxu0 %v573
    %1383 = vmatprep.subr.mxu0 %v582
    %1384 = vmatpush1.msra.mxu0 %v581
    %1385 = vmatprep.subr.mxu0 %v590
    %1386 = vmatpush1.msra.mxu0 %v589
    %1387 = vmatprep.subr.mxu0 %v598
    %1388 = vmatpush1.msra.mxu0 %v597
    %1389 = vmatprep.subr.mxu0 %v606
    %1390 = vmatpush1.msra.mxu0 %v605
    %1391 = vmatprep.subr.mxu0 %v614
    %1392 = vmatpush1.msra.mxu0 %v613
    %1393 = vmatprep.subr.mxu0 %v622
    %1394 = vmatpush1.msra.mxu0 %v621
    %1395 = vmatprep.subr.mxu0 %v630
    %1396 = vmatpush1.msra.mxu0 %v629
    %1397 = vmatprep.subr.mxu0 %v638
    %1398 = vmatpush1.msra.mxu0 %v637
    %1399 = vmatprep.subr.mxu0 %v646
    %1400 = vmatpush1.msra.mxu0 %v645
    %1401 = vmatprep.subr.mxu0 %v654
    %1402 = vmatpush1.msra.mxu0 %v653
    %1403 = vmatprep.subr.mxu0 %v662
    %1404 = vmatpush1.msra.mxu0 %v661
    %1405 = vmatprep.subr.mxu0 %v670
    %1406 = vmatpush1.msra.mxu0 %v669
    %1407 = vmatprep.subr.mxu0 %v678
    %1408 = vmatpush1.msra.mxu0 %v677
    %1409 = vmatprep.subr.mxu0 %v686
    %1410 = vmatpush1.msra.mxu0 %v685
    %1411 = vmatprep.subr.mxu0 %v694
    %1412 = vmatpush1.msra.mxu0 %v693
    %1413 = vmatprep.subr.mxu0 %v702
    %1414 = vmatpush1.msra.mxu0 %v701
    %1415 = vmatprep.subr.mxu0 %v710
    %1416 = vmatpush1.msra.mxu0 %v709
    %1417 = vmatprep.subr.mxu0 %v718
    %1418 = vmatpush1.msra.mxu0 %v717
    %1419 = vmatprep.subr.mxu0 %v726
    %1420 = vmatpush1.msra.mxu0 %v725
    %1421 = vmatprep.subr.mxu0 %v734
    %1422 = vmatpush1.msra.mxu0 %v733
    %1423 = vmatprep.subr.mxu0 %v742
    %1424 = vmatpush1.msra.mxu0 %v741
    %1425 = vmatprep.subr.mxu0 %v750
    %1426 = vmatpush1.msra.mxu0 %v749
    %1427 = vmatprep.subr.mxu0 %v758
    %1428 = vmatpush1.msra.mxu0 %v757
    %1429 = vmatprep.subr.mxu0 %v766
    %1430 = vmatpush1.msra.mxu0 %v765
    %1431 = vmatprep.subr.mxu0 %v774
    %1432 = vmatpush1.msra.mxu0 %v773
    %1433 = vmatprep.subr.mxu0 %v782
    %1434 = vmatpush1.msra.mxu0 %v781
    %1435 = vmatprep.subr.mxu0 %v790
    %1436 = vmatpush1.msra.mxu0 %v789
    %1437 = vmatprep.subr.mxu0 %v798
    %1438 = vmatpush1.msra.mxu0 %v797
    %1439 = vmatprep.subr.mxu0 %v806
    %1440 = vmatpush1.msra.mxu0 %v805
    %1441 = vmatprep.mubr.f32.mxu0 %v941
    %1442 = vmatmul.mubr.f32.gmra.mrb[0].mxu0 %v933
    %v1443 = vpop.f32.mrb[0].mxu0
    %v1444 = vadd.f32 %v1373, %v1443
    %v1445 = vpop.f32.mrb[0].mxu0
    %v1446 = vadd.f32 %v1375, %v1445
    %1447 = vdwg.mxu0
    %1448 = vmatprep.subr.mxu0 %v814
    %1449 = vmatpush1.msra.mxu0 %v813
    %1450 = vmatprep.subr.mxu0 %v822
    %1451 = vmatpush1.msra.mxu0 %v821
    %1452 = vmatprep.subr.mxu0 %v830
    %1453 = vmatpush1.msra.mxu0 %v829
    %1454 = vmatprep.subr.mxu0 %v838
    %1455 = vmatpush1.msra.mxu0 %v837
    %1456 = vmatprep.subr.mxu0 %v846
    %1457 = vmatpush1.msra.mxu0 %v845
    %1458 = vmatprep.subr.mxu0 %v854
    %1459 = vmatpush1.msra.mxu0 %v853
    %1460 = vmatprep.subr.mxu0 %v862
    %1461 = vmatpush1.msra.mxu0 %v861
    %1462 = vmatprep.subr.mxu0 %v870
    %1463 = vmatpush1.msra.mxu0 %v869
    %1464 = vmatprep.subr.mxu0 %v878
    %1465 = vmatpush1.msra.mxu0 %v877
    %1466 = vmatprep.subr.mxu0 %v886
    %1467 = vmatpush1.msra.mxu0 %v885
    %1468 = vmatprep.subr.mxu0 %v894
    %1469 = vmatpush1.msra.mxu0 %v893
    %1470 = vmatprep.subr.mxu0 %v902
    %1471 = vmatpush1.msra.mxu0 %v901
    %1472 = vmatprep.subr.mxu0 0.0
    %1473 = vmatpush1.msra.mxu0 0.0
    %1474 = vmatprep.subr.mxu0 0.0
    %1475 = vmatpush1.msra.mxu0 0.0
    %1476 = vmatprep.subr.mxu0 0.0
    %1477 = vmatpush1.msra.mxu0 0.0
    %1478 = vmatprep.subr.mxu0 0.0
    %1479 = vmatpush1.msra.mxu0 0.0
    %1480 = vmatprep.subr.mxu0 0.0
    %1481 = vmatpush1.msra.mxu0 0.0
    %1482 = vmatprep.subr.mxu0 0.0
    %1483 = vmatpush1.msra.mxu0 0.0
    %1484 = vmatprep.subr.mxu0 0.0
    %1485 = vmatpush1.msra.mxu0 0.0
    %1486 = vmatprep.subr.mxu0 0.0
    %1487 = vmatpush1.msra.mxu0 0.0
    %1488 = vmatprep.subr.mxu0 0.0
    %1489 = vmatpush1.msra.mxu0 0.0
    %1490 = vmatprep.subr.mxu0 0.0
    %1491 = vmatpush1.msra.mxu0 0.0
    %1492 = vmatprep.subr.mxu0 0.0
    %1493 = vmatpush1.msra.mxu0 0.0
    %1494 = vmatprep.subr.mxu0 0.0
    %1495 = vmatpush1.msra.mxu0 0.0
    %1496 = vmatprep.subr.mxu0 0.0
    %1497 = vmatpush1.msra.mxu0 0.0
    %1498 = vmatprep.subr.mxu0 0.0
    %1499 = vmatpush1.msra.mxu0 0.0
    %1500 = vmatprep.subr.mxu0 0.0
    %1501 = vmatpush1.msra.mxu0 0.0
    %1502 = vmatprep.subr.mxu0 0.0
    %1503 = vmatpush1.msra.mxu0 0.0
    %1504 = vmatprep.subr.mxu0 0.0
    %1505 = vmatpush1.msra.mxu0 0.0
    %1506 = vmatprep.subr.mxu0 0.0
    %1507 = vmatpush1.msra.mxu0 0.0
    %1508 = vmatprep.subr.mxu0 0.0
    %1509 = vmatpush1.msra.mxu0 0.0
    %1510 = vmatprep.subr.mxu0 0.0
    %1511 = vmatpush1.msra.mxu0 0.0
    %1512 = vmatprep.mubr.f32.mxu0 0.0
    %1513 = vmatmul.mubr.f32.gmra.mrb[0].mxu0 %v949
    %v1514 = vpop.f32.mrb[0].mxu0
    %v1515 = vadd.f32 %v1444, %v1514
    %v1516 = vpop.f32.mrb[0].mxu0
    %v1517 = vadd.f32 %v1446, %v1516
    %1518 = vdwg.mxu0
    %1519 = vmatprep.subr.mxu0 %v48
    %1520 = vmatpush1.msra.mxu0 %v47
    %1521 = vmatprep.subr.mxu0 %v56
    %1522 = vmatpush1.msra.mxu0 %v55
    %1523 = vmatprep.subr.mxu0 %v64
    %1524 = vmatpush1.msra.mxu0 %v63
    %1525 = vmatprep.subr.mxu0 %v72
    %1526 = vmatpush1.msra.mxu0 %v71
    %1527 = vmatprep.subr.mxu0 %v80
    %1528 = vmatpush1.msra.mxu0 %v79
    %1529 = vmatprep.subr.mxu0 %v88
    %1530 = vmatpush1.msra.mxu0 %v87
    %1531 = vmatprep.subr.mxu0 %v96
    %1532 = vmatpush1.msra.mxu0 %v95
    %1533 = vmatprep.subr.mxu0 %v104
    %1534 = vmatpush1.msra.mxu0 %v103
    %1535 = vmatprep.subr.mxu0 %v112
    %1536 = vmatpush1.msra.mxu0 %v111
    %1537 = vmatprep.subr.mxu0 %v120
    %1538 = vmatpush1.msra.mxu0 %v119
    %1539 = vmatprep.subr.mxu0 %v128
    %1540 = vmatpush1.msra.mxu0 %v127
    %1541 = vmatprep.subr.mxu0 %v136
    %1542 = vmatpush1.msra.mxu0 %v135
    %1543 = vmatprep.subr.mxu0 %v144
    %1544 = vmatpush1.msra.mxu0 %v143
    %1545 = vmatprep.subr.mxu0 %v152
    %1546 = vmatpush1.msra.mxu0 %v151
    %1547 = vmatprep.subr.mxu0 %v160
    %1548 = vmatpush1.msra.mxu0 %v159
    %1549 = vmatprep.subr.mxu0 %v168
    %1550 = vmatpush1.msra.mxu0 %v167
    %1551 = vmatprep.subr.mxu0 %v176
    %1552 = vmatpush1.msra.mxu0 %v175
    %1553 = vmatprep.subr.mxu0 %v184
    %1554 = vmatpush1.msra.mxu0 %v183
    %1555 = vmatprep.subr.mxu0 %v192
    %1556 = vmatpush1.msra.mxu0 %v191
    %1557 = vmatprep.subr.mxu0 %v200
    %1558 = vmatpush1.msra.mxu0 %v199
    %1559 = vmatprep.subr.mxu0 %v208
    %1560 = vmatpush1.msra.mxu0 %v207
    %1561 = vmatprep.subr.mxu0 %v216
    %1562 = vmatpush1.msra.mxu0 %v215
    %1563 = vmatprep.subr.mxu0 %v224
    %1564 = vmatpush1.msra.mxu0 %v223
    %1565 = vmatprep.subr.mxu0 %v232
    %1566 = vmatpush1.msra.mxu0 %v231
    %1567 = vmatprep.subr.mxu0 %v240
    %1568 = vmatpush1.msra.mxu0 %v239
    %1569 = vmatprep.subr.mxu0 %v248
    %1570 = vmatpush1.msra.mxu0 %v247
    %1571 = vmatprep.subr.mxu0 %v256
    %1572 = vmatpush1.msra.mxu0 %v255
    %1573 = vmatprep.subr.mxu0 %v264
    %1574 = vmatpush1.msra.mxu0 %v263
    %1575 = vmatprep.subr.mxu0 %v272
    %1576 = vmatpush1.msra.mxu0 %v271
    %1577 = vmatprep.subr.mxu0 %v280
    %1578 = vmatpush1.msra.mxu0 %v279
    %1579 = vmatprep.subr.mxu0 %v288
    %1580 = vmatpush1.msra.mxu0 %v287
    %1581 = vmatprep.subr.mxu0 %v296
    %1582 = vmatpush1.msra.mxu0 %v295
    %1583 = vmatprep.mubr.f32.mxu0 %v924
    %1584 = vmatmul.mubr.f32.gmra.mrb[0].mxu0 %v916
    %v1585 = vpop.f32.mrb[0].mxu0
    %v1586 = vadd.f32 0.0, %v1585
    %v1587 = vpop.f32.mrb[0].mxu0
    %v1588 = vadd.f32 0.0, %v1587
    %1589 = vdwg.mxu0
    %1590 = vmatprep.subr.mxu0 %v304
    %1591 = vmatpush1.msra.mxu0 %v303
    %1592 = vmatprep.subr.mxu0 %v312
    %1593 = vmatpush1.msra.mxu0 %v311
    %1594 = vmatprep.subr.mxu0 %v320
    %1595 = vmatpush1.msra.mxu0 %v319
    %1596 = vmatprep.subr.mxu0 %v328
    %1597 = vmatpush1.msra.mxu0 %v327
    %1598 = vmatprep.subr.mxu0 %v336
    %1599 = vmatpush1.msra.mxu0 %v335
    %1600 = vmatprep.subr.mxu0 %v344
    %1601 = vmatpush1.msra.mxu0 %v343
    %1602 = vmatprep.subr.mxu0 %v352
    %1603 = vmatpush1.msra.mxu0 %v351
    %1604 = vmatprep.subr.mxu0 %v360
    %1605 = vmatpush1.msra.mxu0 %v359
    %1606 = vmatprep.subr.mxu0 %v368
    %1607 = vmatpush1.msra.mxu0 %v367
    %1608 = vmatprep.subr.mxu0 %v376
    %1609 = vmatpush1.msra.mxu0 %v375
    %1610 = vmatprep.subr.mxu0 %v384
    %1611 = vmatpush1.msra.mxu0 %v383
    %1612 = vmatprep.subr.mxu0 %v392
    %1613 = vmatpush1.msra.mxu0 %v391
    %1614 = vmatprep.subr.mxu0 %v400
    %1615 = vmatpush1.msra.mxu0 %v399
    %1616 = vmatprep.subr.mxu0 %v408
    %1617 = vmatpush1.msra.mxu0 %v407
    %1618 = vmatprep.subr.mxu0 %v416
    %1619 = vmatpush1.msra.mxu0 %v415
    %1620 = vmatprep.subr.mxu0 %v424
    %1621 = vmatpush1.msra.mxu0 %v423
    %1622 = vmatprep.subr.mxu0 %v432
    %1623 = vmatpush1.msra.mxu0 %v431
    %1624 = vmatprep.subr.mxu0 %v440
    %1625 = vmatpush1.msra.mxu0 %v439
    %1626 = vmatprep.subr.mxu0 %v448
    %1627 = vmatpush1.msra.mxu0 %v447
    %1628 = vmatprep.subr.mxu0 %v456
    %1629 = vmatpush1.msra.mxu0 %v455
    %1630 = vmatprep.subr.mxu0 %v464
    %1631 = vmatpush1.msra.mxu0 %v463
    %1632 = vmatprep.subr.mxu0 %v472
    %1633 = vmatpush1.msra.mxu0 %v471
    %1634 = vmatprep.subr.mxu0 %v480
    %1635 = vmatpush1.msra.mxu0 %v479
    %1636 = vmatprep.subr.mxu0 %v488
    %1637 = vmatpush1.msra.mxu0 %v487
    %1638 = vmatprep.subr.mxu0 %v496
    %1639 = vmatpush1.msra.mxu0 %v495
    %1640 = vmatprep.subr.mxu0 %v504
    %1641 = vmatpush1.msra.mxu0 %v503
    %1642 = vmatprep.subr.mxu0 %v512
    %1643 = vmatpush1.msra.mxu0 %v511
    %1644 = vmatprep.subr.mxu0 %v520
    %1645 = vmatpush1.msra.mxu0 %v519
    %1646 = vmatprep.subr.mxu0 %v528
    %1647 = vmatpush1.msra.mxu0 %v527
    %1648 = vmatprep.subr.mxu0 %v536
    %1649 = vmatpush1.msra.mxu0 %v535
    %1650 = vmatprep.subr.mxu0 %v544
    %1651 = vmatpush1.msra.mxu0 %v543
    %1652 = vmatprep.subr.mxu0 %v552
    %1653 = vmatpush1.msra.mxu0 %v551
    %1654 = vmatprep.mubr.f32.mxu0 %v925
    %1655 = vmatmul.mubr.f32.gmra.mrb[0].mxu0 %v923
    %v1656 = vpop.f32.mrb[0].mxu0
    %v1657 = vadd.f32 %v1586, %v1656
    %v1658 = vpop.f32.mrb[0].mxu0
    %v1659 = vadd.f32 %v1588, %v1658
    %1660 = vdwg.mxu0
    %1661 = vmatprep.subr.mxu0 %v560
    %1662 = vmatpush1.msra.mxu0 %v559
    %1663 = vmatprep.subr.mxu0 %v568
    %1664 = vmatpush1.msra.mxu0 %v567
    %1665 = vmatprep.subr.mxu0 %v576
    %1666 = vmatpush1.msra.mxu0 %v575
    %1667 = vmatprep.subr.mxu0 %v584
    %1668 = vmatpush1.msra.mxu0 %v583
    %1669 = vmatprep.subr.mxu0 %v592
    %1670 = vmatpush1.msra.mxu0 %v591
    %1671 = vmatprep.subr.mxu0 %v600
    %1672 = vmatpush1.msra.mxu0 %v599
    %1673 = vmatprep.subr.mxu0 %v608
    %1674 = vmatpush1.msra.mxu0 %v607
    %1675 = vmatprep.subr.mxu0 %v616
    %1676 = vmatpush1.msra.mxu0 %v615
    %1677 = vmatprep.subr.mxu0 %v624
    %1678 = vmatpush1.msra.mxu0 %v623
    %1679 = vmatprep.subr.mxu0 %v632
    %1680 = vmatpush1.msra.mxu0 %v631
    %1681 = vmatprep.subr.mxu0 %v640
    %1682 = vmatpush1.msra.mxu0 %v639
    %1683 = vmatprep.subr.mxu0 %v648
    %1684 = vmatpush1.msra.mxu0 %v647
    %1685 = vmatprep.subr.mxu0 %v656
    %1686 = vmatpush1.msra.mxu0 %v655
    %1687 = vmatprep.subr.mxu0 %v664
    %1688 = vmatpush1.msra.mxu0 %v663
    %1689 = vmatprep.subr.mxu0 %v672
    %1690 = vmatpush1.msra.mxu0 %v671
    %1691 = vmatprep.subr.mxu0 %v680
    %1692 = vmatpush1.msra.mxu0 %v679
    %1693 = vmatprep.subr.mxu0 %v688
    %1694 = vmatpush1.msra.mxu0 %v687
    %1695 = vmatprep.subr.mxu0 %v696
    %1696 = vmatpush1.msra.mxu0 %v695
    %1697 = vmatprep.subr.mxu0 %v704
    %1698 = vmatpush1.msra.mxu0 %v703
    %1699 = vmatprep.subr.mxu0 %v712
    %1700 = vmatpush1.msra.mxu0 %v711
    %1701 = vmatprep.subr.mxu0 %v720
    %1702 = vmatpush1.msra.mxu0 %v719
    %1703 = vmatprep.subr.mxu0 %v728
    %1704 = vmatpush1.msra.mxu0 %v727
    %1705 = vmatprep.subr.mxu0 %v736
    %1706 = vmatpush1.msra.mxu0 %v735
    %1707 = vmatprep.subr.mxu0 %v744
    %1708 = vmatpush1.msra.mxu0 %v743
    %1709 = vmatprep.subr.mxu0 %v752
    %1710 = vmatpush1.msra.mxu0 %v751
    %1711 = vmatprep.subr.mxu0 %v760
    %1712 = vmatpush1.msra.mxu0 %v759
    %1713 = vmatprep.subr.mxu0 %v768
    %1714 = vmatpush1.msra.mxu0 %v767
    %1715 = vmatprep.subr.mxu0 %v776
    %1716 = vmatpush1.msra.mxu0 %v775
    %1717 = vmatprep.subr.mxu0 %v784
    %1718 = vmatpush1.msra.mxu0 %v783
    %1719 = vmatprep.subr.mxu0 %v792
    %1720 = vmatpush1.msra.mxu0 %v791
    %1721 = vmatprep.subr.mxu0 %v800
    %1722 = vmatpush1.msra.mxu0 %v799
    %1723 = vmatprep.subr.mxu0 %v808
    %1724 = vmatpush1.msra.mxu0 %v807
    %1725 = vmatprep.mubr.f32.mxu0 %v941
    %1726 = vmatmul.mubr.f32.gmra.mrb[0].mxu0 %v933
    %v1727 = vpop.f32.mrb[0].mxu0
    %v1728 = vadd.f32 %v1657, %v1727
    %v1729 = vpop.f32.mrb[0].mxu0
    %v1730 = vadd.f32 %v1659, %v1729
    %1731 = vdwg.mxu0
    %1732 = vmatprep.subr.mxu0 %v816
    %1733 = vmatpush1.msra.mxu0 %v815
    %1734 = vmatprep.subr.mxu0 %v824
    %1735 = vmatpush1.msra.mxu0 %v823
    %1736 = vmatprep.subr.mxu0 %v832
    %1737 = vmatpush1.msra.mxu0 %v831
    %1738 = vmatprep.subr.mxu0 %v840
    %1739 = vmatpush1.msra.mxu0 %v839
    %1740 = vmatprep.subr.mxu0 %v848
    %1741 = vmatpush1.msra.mxu0 %v847
    %1742 = vmatprep.subr.mxu0 %v856
    %1743 = vmatpush1.msra.mxu0 %v855
    %1744 = vmatprep.subr.mxu0 %v864
    %1745 = vmatpush1.msra.mxu0 %v863
    %1746 = vmatprep.subr.mxu0 %v872
    %1747 = vmatpush1.msra.mxu0 %v871
    %1748 = vmatprep.subr.mxu0 %v880
    %1749 = vmatpush1.msra.mxu0 %v879
    %1750 = vmatprep.subr.mxu0 %v888
    %1751 = vmatpush1.msra.mxu0 %v887
    %1752 = vmatprep.subr.mxu0 %v896
    %1753 = vmatpush1.msra.mxu0 %v895
    %1754 = vmatprep.subr.mxu0 %v904
    %1755 = vmatpush1.msra.mxu0 %v903
    %1756 = vmatprep.subr.mxu0 0.0
    %1757 = vmatpush1.msra.mxu0 0.0
    %1758 = vmatprep.subr.mxu0 0.0
    %1759 = vmatpush1.msra.mxu0 0.0
    %1760 = vmatprep.subr.mxu0 0.0
    %1761 = vmatpush1.msra.mxu0 0.0
    %1762 = vmatprep.subr.mxu0 0.0
    %1763 = vmatpush1.msra.mxu0 0.0
    %1764 = vmatprep.subr.mxu0 0.0
    %1765 = vmatpush1.msra.mxu0 0.0
    %1766 = vmatprep.subr.mxu0 0.0
    %1767 = vmatpush1.msra.mxu0 0.0
    %1768 = vmatprep.subr.mxu0 0.0
    %1769 = vmatpush1.msra.mxu0 0.0
    %1770 = vmatprep.subr.mxu0 0.0
    %1771 = vmatpush1.msra.mxu0 0.0
    %1772 = vmatprep.subr.mxu0 0.0
    %1773 = vmatpush1.msra.mxu0 0.0
    %1774 = vmatprep.subr.mxu0 0.0
    %1775 = vmatpush1.msra.mxu0 0.0
    %1776 = vmatprep.subr.mxu0 0.0
    %1777 = vmatpush1.msra.mxu0 0.0
    %1778 = vmatprep.subr.mxu0 0.0
    %1779 = vmatpush1.msra.mxu0 0.0
    %1780 = vmatprep.subr.mxu0 0.0
    %1781 = vmatpush1.msra.mxu0 0.0
    %1782 = vmatprep.subr.mxu0 0.0
    %1783 = vmatpush1.msra.mxu0 0.0
    %1784 = vmatprep.subr.mxu0 0.0
    %1785 = vmatpush1.msra.mxu0 0.0
    %1786 = vmatprep.subr.mxu0 0.0
    %1787 = vmatpush1.msra.mxu0 0.0
    %1788 = vmatprep.subr.mxu0 0.0
    %1789 = vmatpush1.msra.mxu0 0.0
    %1790 = vmatprep.subr.mxu0 0.0
    %1791 = vmatpush1.msra.mxu0 0.0
    %1792 = vmatprep.subr.mxu0 0.0
    %1793 = vmatpush1.msra.mxu0 0.0
    %1794 = vmatprep.subr.mxu0 0.0
    %1795 = vmatpush1.msra.mxu0 0.0
    %1796 = vmatprep.mubr.f32.mxu0 0.0
    %1797 = vmatmul.mubr.f32.gmra.mrb[0].mxu0 %v949
    %v1798 = vpop.f32.mrb[0].mxu0
    %v1799 = vadd.f32 %v1728, %v1798
    %v1800 = vpop.f32.mrb[0].mxu0
    %v1801 = vadd.f32 %v1730, %v1800
    %1802 = vdwg.mxu0
    %1803 = vmatprep.subr.mxu0 %v50
    %1804 = vmatpush1.msra.mxu0 %v49
    %1805 = vmatprep.subr.mxu0 %v58
    %1806 = vmatpush1.msra.mxu0 %v57
    %1807 = vmatprep.subr.mxu0 %v66
    %1808 = vmatpush1.msra.mxu0 %v65
    %1809 = vmatprep.subr.mxu0 %v74
    %1810 = vmatpush1.msra.mxu0 %v73
    %1811 = vmatprep.subr.mxu0 %v82
    %1812 = vmatpush1.msra.mxu0 %v81
    %1813 = vmatprep.subr.mxu0 %v90
    %1814 = vmatpush1.msra.mxu0 %v89
    %1815 = vmatprep.subr.mxu0 %v98
    %1816 = vmatpush1.msra.mxu0 %v97
    %1817 = vmatprep.subr.mxu0 %v106
    %1818 = vmatpush1.msra.mxu0 %v105
    %1819 = vmatprep.subr.mxu0 %v114
    %1820 = vmatpush1.msra.mxu0 %v113
    %1821 = vmatprep.subr.mxu0 %v122
    %1822 = vmatpush1.msra.mxu0 %v121
    %1823 = vmatprep.subr.mxu0 %v130
    %1824 = vmatpush1.msra.mxu0 %v129
    %1825 = vmatprep.subr.mxu0 %v138
    %1826 = vmatpush1.msra.mxu0 %v137
    %1827 = vmatprep.subr.mxu0 %v146
    %1828 = vmatpush1.msra.mxu0 %v145
    %1829 = vmatprep.subr.mxu0 %v154
    %1830 = vmatpush1.msra.mxu0 %v153
    %1831 = vmatprep.subr.mxu0 %v162
    %1832 = vmatpush1.msra.mxu0 %v161
    %1833 = vmatprep.subr.mxu0 %v170
    %1834 = vmatpush1.msra.mxu0 %v169
    %1835 = vmatprep.subr.mxu0 %v178
    %1836 = vmatpush1.msra.mxu0 %v177
    %1837 = vmatprep.subr.mxu0 %v186
    %1838 = vmatpush1.msra.mxu0 %v185
    %1839 = vmatprep.subr.mxu0 %v194
    %1840 = vmatpush1.msra.mxu0 %v193
    %1841 = vmatprep.subr.mxu0 %v202
    %1842 = vmatpush1.msra.mxu0 %v201
    %1843 = vmatprep.subr.mxu0 %v210
    %1844 = vmatpush1.msra.mxu0 %v209
    %1845 = vmatprep.subr.mxu0 %v218
    %1846 = vmatpush1.msra.mxu0 %v217
    %1847 = vmatprep.subr.mxu0 %v226
    %1848 = vmatpush1.msra.mxu0 %v225
    %1849 = vmatprep.subr.mxu0 %v234
    %1850 = vmatpush1.msra.mxu0 %v233
    %1851 = vmatprep.subr.mxu0 %v242
    %1852 = vmatpush1.msra.mxu0 %v241
    %1853 = vmatprep.subr.mxu0 %v250
    %1854 = vmatpush1.msra.mxu0 %v249
    %1855 = vmatprep.subr.mxu0 %v258
    %1856 = vmatpush1.msra.mxu0 %v257
    %1857 = vmatprep.subr.mxu0 %v266
    %1858 = vmatpush1.msra.mxu0 %v265
    %1859 = vmatprep.subr.mxu0 %v274
    %1860 = vmatpush1.msra.mxu0 %v273
    %1861 = vmatprep.subr.mxu0 %v282
    %1862 = vmatpush1.msra.mxu0 %v281
    %1863 = vmatprep.subr.mxu0 %v290
    %1864 = vmatpush1.msra.mxu0 %v289
    %1865 = vmatprep.subr.mxu0 %v298
    %1866 = vmatpush1.msra.mxu0 %v297
    %1867 = vmatprep.mubr.f32.mxu0 %v924
    %1868 = vmatmul.mubr.f32.gmra.mrb[0].mxu0 %v916
    %v1869 = vpop.f32.mrb[0].mxu0
    %v1870 = vadd.f32 0.0, %v1869
    %v1871 = vpop.f32.mrb[0].mxu0
    %v1872 = vadd.f32 0.0, %v1871
    %1873 = vdwg.mxu0
    %1874 = vmatprep.subr.mxu0 %v306
    %1875 = vmatpush1.msra.mxu0 %v305
    %1876 = vmatprep.subr.mxu0 %v314
    %1877 = vmatpush1.msra.mxu0 %v313
    %1878 = vmatprep.subr.mxu0 %v322
    %1879 = vmatpush1.msra.mxu0 %v321
    %1880 = vmatprep.subr.mxu0 %v330
    %1881 = vmatpush1.msra.mxu0 %v329
    %1882 = vmatprep.subr.mxu0 %v338
    %1883 = vmatpush1.msra.mxu0 %v337
    %1884 = vmatprep.subr.mxu0 %v346
    %1885 = vmatpush1.msra.mxu0 %v345
    %1886 = vmatprep.subr.mxu0 %v354
    %1887 = vmatpush1.msra.mxu0 %v353
    %1888 = vmatprep.subr.mxu0 %v362
    %1889 = vmatpush1.msra.mxu0 %v361
    %1890 = vmatprep.subr.mxu0 %v370
    %1891 = vmatpush1.msra.mxu0 %v369
    %1892 = vmatprep.subr.mxu0 %v378
    %1893 = vmatpush1.msra.mxu0 %v377
    %1894 = vmatprep.subr.mxu0 %v386
    %1895 = vmatpush1.msra.mxu0 %v385
    %1896 = vmatprep.subr.mxu0 %v394
    %1897 = vmatpush1.msra.mxu0 %v393
    %1898 = vmatprep.subr.mxu0 %v402
    %1899 = vmatpush1.msra.mxu0 %v401
    %1900 = vmatprep.subr.mxu0 %v410
    %1901 = vmatpush1.msra.mxu0 %v409
    %1902 = vmatprep.subr.mxu0 %v418
    %1903 = vmatpush1.msra.mxu0 %v417
    %1904 = vmatprep.subr.mxu0 %v426
    %1905 = vmatpush1.msra.mxu0 %v425
    %1906 = vmatprep.subr.mxu0 %v434
    %1907 = vmatpush1.msra.mxu0 %v433
    %1908 = vmatprep.subr.mxu0 %v442
    %1909 = vmatpush1.msra.mxu0 %v441
    %1910 = vmatprep.subr.mxu0 %v450
    %1911 = vmatpush1.msra.mxu0 %v449
    %1912 = vmatprep.subr.mxu0 %v458
    %1913 = vmatpush1.msra.mxu0 %v457
    %1914 = vmatprep.subr.mxu0 %v466
    %1915 = vmatpush1.msra.mxu0 %v465
    %1916 = vmatprep.subr.mxu0 %v474
    %1917 = vmatpush1.msra.mxu0 %v473
    %1918 = vmatprep.subr.mxu0 %v482
    %1919 = vmatpush1.msra.mxu0 %v481
    %1920 = vmatprep.subr.mxu0 %v490
    %1921 = vmatpush1.msra.mxu0 %v489
    %1922 = vmatprep.subr.mxu0 %v498
    %1923 = vmatpush1.msra.mxu0 %v497
    %1924 = vmatprep.subr.mxu0 %v506
    %1925 = vmatpush1.msra.mxu0 %v505
    %1926 = vmatprep.subr.mxu0 %v514
    %1927 = vmatpush1.msra.mxu0 %v513
    %1928 = vmatprep.subr.mxu0 %v522
    %1929 = vmatpush1.msra.mxu0 %v521
    %1930 = vmatprep.subr.mxu0 %v530
    %1931 = vmatpush1.msra.mxu0 %v529
    %1932 = vmatprep.subr.mxu0 %v538
    %1933 = vmatpush1.msra.mxu0 %v537
    %1934 = vmatprep.subr.mxu0 %v546
    %1935 = vmatpush1.msra.mxu0 %v545
    %1936 = vmatprep.subr.mxu0 %v554
    %1937 = vmatpush1.msra.mxu0 %v553
    %1938 = vmatprep.mubr.f32.mxu0 %v925
    %1939 = vmatmul.mubr.f32.gmra.mrb[0].mxu0 %v923
    %v1940 = vpop.f32.mrb[0].mxu0
    %v1941 = vadd.f32 %v1870, %v1940
    %v1942 = vpop.f32.mrb[0].mxu0
    %v1943 = vadd.f32 %v1872, %v1942
    %1944 = vdwg.mxu0
    %1945 = vmatprep.subr.mxu0 %v562
    %1946 = vmatpush1.msra.mxu0 %v561
    %1947 = vmatprep.subr.mxu0 %v570
    %1948 = vmatpush1.msra.mxu0 %v569
    %1949 = vmatprep.subr.mxu0 %v578
    %1950 = vmatpush1.msra.mxu0 %v577
    %1951 = vmatprep.subr.mxu0 %v586
    %1952 = vmatpush1.msra.mxu0 %v585
    %1953 = vmatprep.subr.mxu0 %v594
    %1954 = vmatpush1.msra.mxu0 %v593
    %1955 = vmatprep.subr.mxu0 %v602
    %1956 = vmatpush1.msra.mxu0 %v601
    %1957 = vmatprep.subr.mxu0 %v610
    %1958 = vmatpush1.msra.mxu0 %v609
    %1959 = vmatprep.subr.mxu0 %v618
    %1960 = vmatpush1.msra.mxu0 %v617
    %1961 = vmatprep.subr.mxu0 %v626
    %1962 = vmatpush1.msra.mxu0 %v625
    %1963 = vmatprep.subr.mxu0 %v634
    %1964 = vmatpush1.msra.mxu0 %v633
    %1965 = vmatprep.subr.mxu0 %v642
    %1966 = vmatpush1.msra.mxu0 %v641
    %1967 = vmatprep.subr.mxu0 %v650
    %1968 = vmatpush1.msra.mxu0 %v649
    %1969 = vmatprep.subr.mxu0 %v658
    %1970 = vmatpush1.msra.mxu0 %v657
    %1971 = vmatprep.subr.mxu0 %v666
    %1972 = vmatpush1.msra.mxu0 %v665
    %1973 = vmatprep.subr.mxu0 %v674
    %1974 = vmatpush1.msra.mxu0 %v673
    %1975 = vmatprep.subr.mxu0 %v682
    %1976 = vmatpush1.msra.mxu0 %v681
    %1977 = vmatprep.subr.mxu0 %v690
    %1978 = vmatpush1.msra.mxu0 %v689
    %1979 = vmatprep.subr.mxu0 %v698
    %1980 = vmatpush1.msra.mxu0 %v697
    %1981 = vmatprep.subr.mxu0 %v706
    %1982 = vmatpush1.msra.mxu0 %v705
    %1983 = vmatprep.subr.mxu0 %v714
    %1984 = vmatpush1.msra.mxu0 %v713
    %1985 = vmatprep.subr.mxu0 %v722
    %1986 = vmatpush1.msra.mxu0 %v721
    %1987 = vmatprep.subr.mxu0 %v730
    %1988 = vmatpush1.msra.mxu0 %v729
    %1989 = vmatprep.subr.mxu0 %v738
    %1990 = vmatpush1.msra.mxu0 %v737
    %1991 = vmatprep.subr.mxu0 %v746
    %1992 = vmatpush1.msra.mxu0 %v745
    %1993 = vmatprep.subr.mxu0 %v754
    %1994 = vmatpush1.msra.mxu0 %v753
    %1995 = vmatprep.subr.mxu0 %v762
    %1996 = vmatpush1.msra.mxu0 %v761
    %1997 = vmatprep.subr.mxu0 %v770
    %1998 = vmatpush1.msra.mxu0 %v769
    %1999 = vmatprep.subr.mxu0 %v778
    %2000 = vmatpush1.msra.mxu0 %v777
    %2001 = vmatprep.subr.mxu0 %v786
    %2002 = vmatpush1.msra.mxu0 %v785
    %2003 = vmatprep.subr.mxu0 %v794
    %2004 = vmatpush1.msra.mxu0 %v793
    %2005 = vmatprep.subr.mxu0 %v802
    %2006 = vmatpush1.msra.mxu0 %v801
    %2007 = vmatprep.subr.mxu0 %v810
    %2008 = vmatpush1.msra.mxu0 %v809
    %2009 = vmatprep.mubr.f32.mxu0 %v941
    %2010 = vmatmul.mubr.f32.gmra.mrb[0].mxu0 %v933
    %v2011 = vpop.f32.mrb[0].mxu0
    %v2012 = vadd.f32 %v1941, %v2011
    %v2013 = vpop.f32.mrb[0].mxu0
    %v2014 = vadd.f32 %v1943, %v2013
    %2015 = vdwg.mxu0
    %2016 = vmatprep.subr.mxu0 %v818
    %2017 = vmatpush1.msra.mxu0 %v817
    %2018 = vmatprep.subr.mxu0 %v826
    %2019 = vmatpush1.msra.mxu0 %v825
    %2020 = vmatprep.subr.mxu0 %v834
    %2021 = vmatpush1.msra.mxu0 %v833
    %2022 = vmatprep.subr.mxu0 %v842
    %2023 = vmatpush1.msra.mxu0 %v841
    %2024 = vmatprep.subr.mxu0 %v850
    %2025 = vmatpush1.msra.mxu0 %v849
    %2026 = vmatprep.subr.mxu0 %v858
    %2027 = vmatpush1.msra.mxu0 %v857
    %2028 = vmatprep.subr.mxu0 %v866
    %2029 = vmatpush1.msra.mxu0 %v865
    %2030 = vmatprep.subr.mxu0 %v874
    %2031 = vmatpush1.msra.mxu0 %v873
    %2032 = vmatprep.subr.mxu0 %v882
    %2033 = vmatpush1.msra.mxu0 %v881
    %2034 = vmatprep.subr.mxu0 %v890
    %2035 = vmatpush1.msra.mxu0 %v889
    %2036 = vmatprep.subr.mxu0 %v898
    %2037 = vmatpush1.msra.mxu0 %v897
    %2038 = vmatprep.subr.mxu0 %v906
    %2039 = vmatpush1.msra.mxu0 %v905
    %2040 = vmatprep.subr.mxu0 0.0
    %2041 = vmatpush1.msra.mxu0 0.0
    %2042 = vmatprep.subr.mxu0 0.0
    %2043 = vmatpush1.msra.mxu0 0.0
    %2044 = vmatprep.subr.mxu0 0.0
    %2045 = vmatpush1.msra.mxu0 0.0
    %2046 = vmatprep.subr.mxu0 0.0
    %2047 = vmatpush1.msra.mxu0 0.0
    %2048 = vmatprep.subr.mxu0 0.0
    %2049 = vmatpush1.msra.mxu0 0.0
    %2050 = vmatprep.subr.mxu0 0.0
    %2051 = vmatpush1.msra.mxu0 0.0
    %2052 = vmatprep.subr.mxu0 0.0
    %2053 = vmatpush1.msra.mxu0 0.0
    %2054 = vmatprep.subr.mxu0 0.0
    %2055 = vmatpush1.msra.mxu0 0.0
    %2056 = vmatprep.subr.mxu0 0.0
    %2057 = vmatpush1.msra.mxu0 0.0
    %2058 = vmatprep.subr.mxu0 0.0
    %2059 = vmatpush1.msra.mxu0 0.0
    %2060 = vmatprep.subr.mxu0 0.0
    %2061 = vmatpush1.msra.mxu0 0.0
    %2062 = vmatprep.subr.mxu0 0.0
    %2063 = vmatpush1.msra.mxu0 0.0
    %2064 = vmatprep.subr.mxu0 0.0
    %2065 = vmatpush1.msra.mxu0 0.0
    %2066 = vmatprep.subr.mxu0 0.0
    %2067 = vmatpush1.msra.mxu0 0.0
    %2068 = vmatprep.subr.mxu0 0.0
    %2069 = vmatpush1.msra.mxu0 0.0
    %2070 = vmatprep.subr.mxu0 0.0
    %2071 = vmatpush1.msra.mxu0 0.0
    %2072 = vmatprep.subr.mxu0 0.0
    %2073 = vmatpush1.msra.mxu0 0.0
    %2074 = vmatprep.subr.mxu0 0.0
    %2075 = vmatpush1.msra.mxu0 0.0
    %2076 = vmatprep.subr.mxu0 0.0
    %2077 = vmatpush1.msra.mxu0 0.0
    %2078 = vmatprep.subr.mxu0 0.0
    %2079 = vmatpush1.msra.mxu0 0.0
    %2080 = vmatprep.mubr.f32.mxu0 0.0
    %2081 = vmatmul.mubr.f32.gmra.mrb[0].mxu0 %v949
    %v2082 = vpop.f32.mrb[0].mxu0
    %v2083 = vadd.f32 %v2012, %v2082
    %v2084 = vpop.f32.mrb[0].mxu0
    %v2085 = vadd.f32 %v2014, %v2084
    %2086 = vdwg.mxu0
    %v2087 = vmax.f32 %v1231, %v1515
    %v2088 = vmax.f32 %v1233, %v1517
    %v2089 = vmax.f32 %v1799, %v2083
    %v2090 = vmax.f32 %v1801, %v2085
    %v2091 = vmax.f32 %v2087, %v2089
    %v2092 = vmax.f32 %v2088, %v2090
    %v2093 = vld [vmem:[#allocation5] sm:$0x3]
    %v2095 = vlaneseq
    %v2096 = vshrl.u32 %v2095, 7
    %v2097 = vsub.s32 0, %v2096
    %v2098 = vrot.slane %v2093, %v2097
    %v2099 = vlaneseq
    %v2100 = vshrl.u32 %v2099, 7
    %v2101 = vsub.s32 1, %v2100
    %v2102 = vrot.slane %v2093, %v2101
    %v2105 = vadd.f32 %v2091, %v2098
    %v2106 = vadd.f32 %v2092, %v2102
    %v2107 = vmax.f32 %v2105, 0.0
    %v2108 = vmax.f32 %v2106, 0.0
    %v2111 = vcombine.low %v2107, %v2108
    %v2113 = vunpack.c.l.s4 1983009808
    %v2114 = vunpack.c.0.s8 %v2113
    %v2115 = vlaneseq
    %v2116 = vshrl.u32 %v2115, 7
    %v2117 = vsub.s32 %v2114, %v2116
    %v2118 = vrot.slane %v2111, %v2117
    %2120 = vst [vmem:[#allocation7] sm:$0xf] %v2118
    // Predicated region
    $region22: #{model_forward.1} parent=1 // pred_check
      _
    $region23: #{model_forward.1} parent=1 // pred_check_branch
      %2122 = sbr.rel (0) target = $region25
    $region24: #{model_forward.1} parent=1 // pred_region
      %s2124 = ssub.s32 64, 64
      %2125 = vsyncadd [#allocation4], %s2124
      %s2127 = sshll.u32 [#allocation7], 4
      %s2128 = int_to_ptr.vmem [resolvable:$true] %s2127
      %2130 = dma.vmem_to_hbm [thread:$0]  %s2128, 64, %s3, [#allocation4]
    $region25: #{model_forward.1} parent=1 // pred_fallthru
      _
    // Predicated region
    $region26: #{model_forward.1} parent=1 // pred_check
      _
    $region27: #{model_forward.1} parent=1 // pred_check_branch
      %2132 = sbr.rel (0) target = $region29
    $region28: #{model_forward.1} parent=1 // pred_region
      %2133 = dma.done [#allocation4], 64
    $region29: #{model_forward.1} parent=1 // pred_fallthru
      _
    %2134 = vsyncpa [#allocation3], 1
    %2135 = vsyncpa [#allocation6], 1
    %2136 = vsyncpa [#allocation4], 1

</llo_original>
